<compile_context>
chip_gen: v7x
topology: tpu7x:2x2x1
jax: 0.10.0
libtpu: 0.0.40
codegen_flags: <defaults>
</compile_context>

<pallas_src>
import math

import jax
import jax.numpy as jnp
from jax import lax
from jax.experimental import pallas as pl
from jax.experimental.pallas import tpu as pltpu

# ----------------------------- model dims (small, synthetic) -----------------
E_DIM = 16                  # encoder_dim
D_DIM = 32                  # decoder_dim
HEADS = 4
ATTN_DIM = D_DIM            # attention_dim defaults to decoder_dim in the spec
VOCAB = 128                 # synthetic lm_head vocab (multiple of 128 -> lane-dense)
L_TGT = 8                   # decoder sequence length
L_SRC = 12                  # encoder sequence length
LN_EPS = 1e-5

CAT_DIM = HEADS * ATTN_DIM + D_DIM      # [A_0|A_1|A_2|A_3|dec] concat width = 160

# ------------------------- packed weight-slab row offsets --------------------
_OFF_WQ = 0                               # (D, H*A)      rows  0..32
_OFF_WK = _OFF_WQ + D_DIM                 # (E, H*A)      rows 32..48
_OFF_WV = _OFF_WK + E_DIM                 # (E, H*A)      rows 48..64
_OFF_WATTN = _OFF_WV + E_DIM              # (CAT_DIM, D)  rows 64..224
_OFF_FF1 = _OFF_WATTN + CAT_DIM           # (D, D)        rows 224..256
_OFF_FF2 = _OFF_FF1 + D_DIM               # (D, D)        rows 256..288
_OFF_LM = _OFF_FF2 + D_DIM                # (D, VOCAB)    rows 288..320
_OFF_VEC = _OFF_LM + D_DIM                # 7 x L_TGT replicated rows 320..376
_N_VEC = 7
SLAB_LANES = 128
SLAB_ROWS = _OFF_VEC + _N_VEC * L_TGT     # 376 (multiple of 8)

(_VEC_BO, _VEC_LN1_G, _VEC_LN1_B, _VEC_BFF1, _VEC_BFF2,
 _VEC_LN2_G, _VEC_LN2_B) = range(_N_VEC)

assert HEADS * ATTN_DIM == SLAB_LANES
assert VOCAB == SLAB_LANES
assert SLAB_ROWS % 8 == 0


def _layer_norm(x, gamma, beta):
    mu = jnp.mean(x, axis=-1, keepdims=True)
    var = jnp.mean((x - mu) ** 2, axis=-1, keepdims=True)
    return (x - mu) * lax.rsqrt(var + LN_EPS) * gamma + beta


# ----------------------------------- kernel ----------------------------------
def multihead_extraskip_kernel(dec_ref, enc_ref, w_ref, out_ref):
    dec = dec_ref[...]                       # (L_tgt, D)
    enc = enc_ref[...]                       # (L_src, E)

    def vec(i):                              # pre-replicated (L_tgt, D) rows
        r = _OFF_VEC + i * L_TGT
        return w_ref[r:r + L_TGT, :D_DIM]

    bo, g1, b1 = vec(_VEC_BO), vec(_VEC_LN1_G), vec(_VEC_LN1_B)
    bff1, bff2 = vec(_VEC_BFF1), vec(_VEC_BFF2)
    g2, b2 = vec(_VEC_LN2_G), vec(_VEC_LN2_B)

    # --- lane-packed head projections: 3 lane-dense 2-D matmuls ---------------
    # (scale 1/sqrt(d_dim) is folded into the packed WQ)
    q = jnp.dot(dec, w_ref[_OFF_WQ:_OFF_WQ + D_DIM, :],
                preferred_element_type=jnp.float32)           # (L_tgt, H*A) = (8,128)
    k = jnp.dot(enc, w_ref[_OFF_WK:_OFF_WK + E_DIM, :],
                preferred_element_type=jnp.float32)           # (L_src, H*A) = (12,128)
    v = jnp.dot(enc, w_ref[_OFF_WV:_OFF_WV + E_DIM, :],
                preferred_element_type=jnp.float32)           # (L_src, H*A) = (12,128)

    # --- per-head attention on static lane slices (unrolled, all 2-D) ---------
    pieces = []
    for h in range(HEADS):
        lo = h * ATTN_DIM
        qh = q[:, lo:lo + ATTN_DIM]                           # (L_tgt, A)
        kh = k[:, lo:lo + ATTN_DIM]                           # (L_src, A)
        vh = v[:, lo:lo + ATTN_DIM]                           # (L_src, A)
        s = lax.dot_general(qh, kh, (((1,), (1,)), ((), ())),
                            preferred_element_type=jnp.float32)   # (L_tgt, L_src)
        s = s - jnp.max(s, axis=-1, keepdims=True)
        p = jnp.exp(s)
        p = p * pl.reciprocal(jnp.sum(p, axis=-1, keepdims=True), approx=True)
        pieces.append(jnp.dot(p, vh, preferred_element_type=jnp.float32))  # (L_tgt, A)
    pieces.append(dec)
    x_cat = jnp.concatenate(pieces, axis=1)                   # (L_tgt, CAT_DIM) = (8,160)

    # --- concat + W_O + per-head skip + residual as ONE K=160 matmul ----------
    w_attn = w_ref[_OFF_WATTN:_OFF_WATTN + CAT_DIM, :D_DIM]   # vstack(Wo^T, sum Wo_h^T + I)
    attn_w_skip = jnp.dot(x_cat, w_attn,
                          preferred_element_type=jnp.float32) + bo
    x1 = _layer_norm(attn_w_skip, g1, b1)

    # --- FF -> ReLU -> FF2, residual with LN1 output, LayerNorm 2 -------------
    h1 = jnp.maximum(
        jnp.dot(x1, w_ref[_OFF_FF1:_OFF_FF1 + D_DIM, :D_DIM],
                preferred_element_type=jnp.float32) + bff1, 0.0)
    h2 = jnp.dot(h1, w_ref[_OFF_FF2:_OFF_FF2 + D_DIM, :D_DIM],
                 preferred_element_type=jnp.float32) + bff2
    x2 = _layer_norm(h2 + x1, g2, b2)

    # --- extra skip (+decoder_x), then lm_head (bias-free), lane-dense store --
    y = x2 + dec
    out_ref[...] = jnp.dot(y, w_ref[_OFF_LM:_OFF_LM + D_DIM, :],
                           preferred_element_type=jnp.float32)


# ---------------------------------- wrapper ----------------------------------
def prepare_kernel_params(params):
    """One-time parameter transform: fold scale & skips, pack everything into
    a single (SLAB_ROWS, 128) f32 slab (one DMA)."""
    scale = 1.0 / math.sqrt(D_DIM)                            # PyTorch: QK^T / sqrt(d_dim)

    # heads packed head-major on the lane axis
    wqp = jnp.transpose(params["wq"], (1, 0, 2)).reshape(D_DIM, HEADS * ATTN_DIM) * scale
    wkp = jnp.transpose(params["wk"], (1, 0, 2)).reshape(E_DIM, HEADS * ATTN_DIM)
    wvp = jnp.transpose(params["wv"], (1, 0, 2)).reshape(E_DIM, HEADS * ATTN_DIM)

    # concat_h(A_h + dec) @ Wo^T + b + dec
    #   = [A_0|..|A_3|dec] @ vstack(Wo^T, sum_h Wo_h^T + I) + b
    wo_t = params["wo"].T                                     # (H*A, D)
    wo_skip = (wo_t.reshape(HEADS, ATTN_DIM, D_DIM).sum(axis=0)
               + jnp.eye(D_DIM, dtype=jnp.float32))           # (D, D)
    w_attn = jnp.concatenate([wo_t, wo_skip], axis=0)         # (CAT_DIM, D)

    def pad_lanes(x):
        return jnp.pad(x, ((0, 0), (0, SLAB_LANES - x.shape[1])))

    def rep(vrow):   # replicate a (D,) vector across L_TGT sublanes (no in-kernel bcast)
        return pad_lanes(jnp.broadcast_to(vrow[None, :], (L_TGT, D_DIM)))

    slab = jnp.zeros((SLAB_ROWS, SLAB_LANES), jnp.float32)
    slab = slab.at[_OFF_WQ:_OFF_WQ + D_DIM].set(wqp)
    slab = slab.at[_OFF_WK:_OFF_WK + E_DIM].set(wkp)
    slab = slab.at[_OFF_WV:_OFF_WV + E_DIM].set(wvp)
    slab = slab.at[_OFF_WATTN:_OFF_WATTN + CAT_DIM].set(pad_lanes(w_attn))
    slab = slab.at[_OFF_FF1:_OFF_FF1 + D_DIM].set(pad_lanes(params["wff1"].T))
    slab = slab.at[_OFF_FF2:_OFF_FF2 + D_DIM].set(pad_lanes(params["wff2"].T))
    slab = slab.at[_OFF_LM:_OFF_LM + D_DIM].set(params["wlm"].T)

    vec_rows = [params["bo"], params["ln1_g"], params["ln1_b"],
                params["bff1"], params["bff2"], params["ln2_g"], params["ln2_b"]]
    for i, vrow in enumerate(vec_rows):
        r = _OFF_VEC + i * L_TGT
        slab = slab.at[r:r + L_TGT].set(rep(vrow))
    return slab


def multihead_model_forward(encoder_x, decoder_x, weight_slab):
    """encoder_x: (L_src, E); decoder_x: (L_tgt, D). Returns (L_tgt, VOCAB)."""
    l_src, e = encoder_x.shape
    l_tgt, d = decoder_x.shape
    assert e == E_DIM and d == D_DIM and l_src == L_SRC and l_tgt == L_TGT

    vmem = pl.BlockSpec(memory_space=pltpu.MemorySpace.VMEM)
    # NOTE: gridless single invocation (footprint ~200 KB). For a batch of
    # sequences, add a leading grid axis with dimension_semantics=("parallel",)
    # so both v7x TensorCores are used.
    return pl.pallas_call(
        multihead_extraskip_kernel,
        out_shape=jax.ShapeDtypeStruct((l_tgt, VOCAB), jnp.float32),
        in_specs=[vmem, vmem, vmem],
        out_specs=vmem,
    )(decoder_x, encoder_x, weight_slab)


# ------------------------------ params & reference ---------------------------
def init_params(key):
    ks = jax.random.split(key, 10)

    def lin_w(k, out_dim, in_dim):
        bound = 1.0 / (in_dim ** 0.5)
        return jax.random.uniform(k, (out_dim, in_dim), jnp.float32, -bound, bound)

    def lin_b(k, out_dim, in_dim):
        bound = 1.0 / (in_dim ** 0.5)
        return jax.random.uniform(k, (out_dim,), jnp.float32, -bound, bound)

    return {
        # CrossAttentionSingle heads: raw torch.randn weights, no bias
        "wq": jax.random.normal(ks[0], (HEADS, D_DIM, ATTN_DIM), jnp.float32),
        "wk": jax.random.normal(ks[1], (HEADS, E_DIM, ATTN_DIM), jnp.float32),
        "wv": jax.random.normal(ks[2], (HEADS, E_DIM, ATTN_DIM), jnp.float32),
        # W_O: Linear(heads*attn_dim -> d_dim)
        "wo": lin_w(ks[3], D_DIM, HEADS * ATTN_DIM),
        "bo": lin_b(ks[4], D_DIM, HEADS * ATTN_DIM),
        # LayerNorm 1 / 2
        "ln1_g": jnp.ones((D_DIM,), jnp.float32),
        "ln1_b": jnp.zeros((D_DIM,), jnp.float32),
        "ln2_g": jnp.ones((D_DIM,), jnp.float32),
        "ln2_b": jnp.zeros((D_DIM,), jnp.float32),
        # FF / FF2: Linear(d_dim -> d_dim)
        "wff1": lin_w(ks[5], D_DIM, D_DIM), "bff1": lin_b(ks[6], D_DIM, D_DIM),
        "wff2": lin_w(ks[7], D_DIM, D_DIM), "bff2": lin_b(ks[8], D_DIM, D_DIM),
        # synthetic lm_head (Linear, bias=False)
        "wlm": 0.02 * jax.random.normal(ks[9], (VOCAB, D_DIM), jnp.float32),
    }


def _reference_forward(encoder_x, decoder_x, params):
    """Pure-jnp transcription of the PyTorch forward (for correctness checking)."""
    scale = 1.0 / math.sqrt(D_DIM)
    heads = []
    for h in range(HEADS):
        q = decoder_x @ params["wq"][h]
        k = encoder_x @ params["wk"][h]
        v = encoder_x @ params["wv"][h]
        p = jax.nn.softmax((q @ k.T) * scale, axis=1)
        heads.append(p @ v + decoder_x)                       # per-head extra skip
    concat = jnp.concatenate(heads, axis=1)
    attention = concat @ params["wo"].T + params["bo"]
    x = _layer_norm(attention + decoder_x, params["ln1_g"], params["ln1_b"])
    h1 = jnp.maximum(x @ params["wff1"].T + params["bff1"], 0.0)
    h2 = h1 @ params["wff2"].T + params["bff2"]
    y = _layer_norm(h2 + x, params["ln2_g"], params["ln2_b"])
    y = y + decoder_x                                         # extra skip
    return y @ params["wlm"].T


# ------------------------------------ main ------------------------------------
if __name__ == "__main__":
    key = jax.random.PRNGKey(0)
    k_enc, k_dec, k_par = jax.random.split(key, 3)

    encoder_x = jax.random.normal(k_enc, (L_SRC, E_DIM), jnp.float32)
    decoder_x = jax.random.normal(k_dec, (L_TGT, D_DIM), jnp.float32)
    params = init_params(k_par)
    weight_slab = prepare_kernel_params(params)

    out = multihead_model_forward(encoder_x, decoder_x, weight_slab)
    out = jax.block_until_ready(out)

    assert out.shape == (L_TGT, VOCAB)
    assert bool(jnp.all(jnp.isfinite(out)))

    ref = _reference_forward(encoder_x, decoder_x, params)
    assert jnp.allclose(out, ref, rtol=2e-2, atol=2e-2), (
        "kernel output diverges from reference")

    print("KERNEL_OK")
</pallas_src>

<mosaic_0001>
module attributes {stable_mosaic.version = 11 : i64} {
  func.func @multihead_extraskip_kernel(%arg0: memref<8x32xf32, #tpu.memory_space<vmem>>, %arg1: memref<12x16xf32, #tpu.memory_space<vmem>>, %arg2: memref<376x128xf32, #tpu.memory_space<vmem>>, %arg3: memref<8x128xf32, #tpu.memory_space<vmem>>) attributes {dimension_semantics = [], scalar_prefetch = 0 : i64, scratch_operands = 0 : i64, tpu.core_type = #tpu.core_type<tc>} {
    %c0 = arith.constant 0 : index
    %c0_0 = arith.constant 0 : index
    %0 = vector.load %arg0[%c0, %c0_0] : memref<8x32xf32, #tpu.memory_space<vmem>>, vector<8x32xf32>
    %c0_1 = arith.constant 0 : index
    %c0_2 = arith.constant 0 : index
    %1 = vector.load %arg1[%c0_1, %c0_2] : memref<12x16xf32, #tpu.memory_space<vmem>>, vector<12x16xf32>
    %c320 = arith.constant 320 : index
    %c0_3 = arith.constant 0 : index
    %2 = vector.load %arg2[%c320, %c0_3] : memref<376x128xf32, #tpu.memory_space<vmem>>, vector<8x32xf32>
    %c328 = arith.constant 328 : index
    %c0_4 = arith.constant 0 : index
    %3 = vector.load %arg2[%c328, %c0_4] : memref<376x128xf32, #tpu.memory_space<vmem>>, vector<8x32xf32>
    %c336 = arith.constant 336 : index
    %c0_5 = arith.constant 0 : index
    %4 = vector.load %arg2[%c336, %c0_5] : memref<376x128xf32, #tpu.memory_space<vmem>>, vector<8x32xf32>
    %c344 = arith.constant 344 : index
    %c0_6 = arith.constant 0 : index
    %5 = vector.load %arg2[%c344, %c0_6] : memref<376x128xf32, #tpu.memory_space<vmem>>, vector<8x32xf32>
    %c352 = arith.constant 352 : index
    %c0_7 = arith.constant 0 : index
    %6 = vector.load %arg2[%c352, %c0_7] : memref<376x128xf32, #tpu.memory_space<vmem>>, vector<8x32xf32>
    %c360 = arith.constant 360 : index
    %c0_8 = arith.constant 0 : index
    %7 = vector.load %arg2[%c360, %c0_8] : memref<376x128xf32, #tpu.memory_space<vmem>>, vector<8x32xf32>
    %c368 = arith.constant 368 : index
    %c0_9 = arith.constant 0 : index
    %8 = vector.load %arg2[%c368, %c0_9] : memref<376x128xf32, #tpu.memory_space<vmem>>, vector<8x32xf32>
    %c0_10 = arith.constant 0 : index
    %c0_11 = arith.constant 0 : index
    %9 = vector.load %arg2[%c0_10, %c0_11] : memref<376x128xf32, #tpu.memory_space<vmem>>, vector<32x128xf32>
    %cst = arith.constant dense<0.000000e+00> : vector<8x128xf32>
    %10 = tpu.matmul %0, %9, %cst {dimension_numbers = #tpu.dot_dimension_numbers<[1], [0], [0], [1], [0, 0, 1, 1], [], []>} : vector<8x32xf32>, vector<32x128xf32>, vector<8x128xf32> -> vector<8x128xf32>
    %c32 = arith.constant 32 : index
    %c0_12 = arith.constant 0 : index
    %11 = vector.load %arg2[%c32, %c0_12] : memref<376x128xf32, #tpu.memory_space<vmem>>, vector<16x128xf32>
    %cst_13 = arith.constant dense<0.000000e+00> : vector<12x128xf32>
    %12 = tpu.matmul %1, %11, %cst_13 {dimension_numbers = #tpu.dot_dimension_numbers<[1], [0], [0], [1], [0, 0, 1, 1], [], []>} : vector<12x16xf32>, vector<16x128xf32>, vector<12x128xf32> -> vector<12x128xf32>
    %c48 = arith.constant 48 : index
    %c0_14 = arith.constant 0 : index
    %13 = vector.load %arg2[%c48, %c0_14] : memref<376x128xf32, #tpu.memory_space<vmem>>, vector<16x128xf32>
    %cst_15 = arith.constant dense<0.000000e+00> : vector<12x128xf32>
    %14 = tpu.matmul %1, %13, %cst_15 {dimension_numbers = #tpu.dot_dimension_numbers<[1], [0], [0], [1], [0, 0, 1, 1], [], []>} : vector<12x16xf32>, vector<16x128xf32>, vector<12x128xf32> -> vector<12x128xf32>
    %15 = vector.extract_strided_slice %10 {offsets = [0, 0], sizes = [8, 32], strides = [1, 1]} : vector<8x128xf32> to vector<8x32xf32>
    %16 = vector.extract_strided_slice %12 {offsets = [0, 0], sizes = [12, 32], strides = [1, 1]} : vector<12x128xf32> to vector<12x32xf32>
    %17 = vector.extract_strided_slice %14 {offsets = [0, 0], sizes = [12, 32], strides = [1, 1]} : vector<12x128xf32> to vector<12x32xf32>
    %cst_16 = arith.constant dense<0.000000e+00> : vector<8x12xf32>
    %18 = tpu.matmul %15, %16, %cst_16 {dimension_numbers = #tpu.dot_dimension_numbers<[1], [1], [0], [0], [0, 0, 1, 0], [], []>} : vector<8x32xf32>, vector<12x32xf32>, vector<8x12xf32> -> vector<8x12xf32>
    %cst_17 = arith.constant dense<0xFF800000> : vector<8xf32>
    %19 = vector.multi_reduction <maximumf>, %18, %cst_17 [1] : vector<8x12xf32> to vector<8xf32>
    %20 = vector.shape_cast %19 : vector<8xf32> to vector<8x1xf32>
    %21 = vector.broadcast %20 : vector<8x1xf32> to vector<8x12xf32>
    %22 = arith.subf %18, %21 : vector<8x12xf32>
    %23 = math.exp %22 : vector<8x12xf32>
    %cst_18 = arith.constant dense<0.000000e+00> : vector<8xf32>
    %24 = vector.multi_reduction <add>, %23, %cst_18 [1] : vector<8x12xf32> to vector<8xf32>
    %25 = vector.shape_cast %24 : vector<8xf32> to vector<8x1xf32>
    %26 = tpu.reciprocal %25 {approx = true} : vector<8x1xf32> -> vector<8x1xf32>
    %27 = vector.broadcast %26 : vector<8x1xf32> to vector<8x12xf32>
    %28 = arith.mulf %23, %27 : vector<8x12xf32>
    %cst_19 = arith.constant dense<0.000000e+00> : vector<8x32xf32>
    %29 = tpu.matmul %28, %17, %cst_19 {dimension_numbers = #tpu.dot_dimension_numbers<[1], [0], [0], [1], [0, 0, 1, 1], [], []>} : vector<8x12xf32>, vector<12x32xf32>, vector<8x32xf32> -> vector<8x32xf32>
    %30 = vector.extract_strided_slice %10 {offsets = [0, 32], sizes = [8, 32], strides = [1, 1]} : vector<8x128xf32> to vector<8x32xf32>
    %31 = vector.extract_strided_slice %12 {offsets = [0, 32], sizes = [12, 32], strides = [1, 1]} : vector<12x128xf32> to vector<12x32xf32>
    %32 = vector.extract_strided_slice %14 {offsets = [0, 32], sizes = [12, 32], strides = [1, 1]} : vector<12x128xf32> to vector<12x32xf32>
    %cst_20 = arith.constant dense<0.000000e+00> : vector<8x12xf32>
    %33 = tpu.matmul %30, %31, %cst_20 {dimension_numbers = #tpu.dot_dimension_numbers<[1], [1], [0], [0], [0, 0, 1, 0], [], []>} : vector<8x32xf32>, vector<12x32xf32>, vector<8x12xf32> -> vector<8x12xf32>
    %cst_21 = arith.constant dense<0xFF800000> : vector<8xf32>
    %34 = vector.multi_reduction <maximumf>, %33, %cst_21 [1] : vector<8x12xf32> to vector<8xf32>
    %35 = vector.shape_cast %34 : vector<8xf32> to vector<8x1xf32>
    %36 = vector.broadcast %35 : vector<8x1xf32> to vector<8x12xf32>
    %37 = arith.subf %33, %36 : vector<8x12xf32>
    %38 = math.exp %37 : vector<8x12xf32>
    %cst_22 = arith.constant dense<0.000000e+00> : vector<8xf32>
    %39 = vector.multi_reduction <add>, %38, %cst_22 [1] : vector<8x12xf32> to vector<8xf32>
    %40 = vector.shape_cast %39 : vector<8xf32> to vector<8x1xf32>
    %41 = tpu.reciprocal %40 {approx = true} : vector<8x1xf32> -> vector<8x1xf32>
    %42 = vector.broadcast %41 : vector<8x1xf32> to vector<8x12xf32>
    %43 = arith.mulf %38, %42 : vector<8x12xf32>
    %cst_23 = arith.constant dense<0.000000e+00> : vector<8x32xf32>
    %44 = tpu.matmul %43, %32, %cst_23 {dimension_numbers = #tpu.dot_dimension_numbers<[1], [0], [0], [1], [0, 0, 1, 1], [], []>} : vector<8x12xf32>, vector<12x32xf32>, vector<8x32xf32> -> vector<8x32xf32>
    %45 = vector.extract_strided_slice %10 {offsets = [0, 64], sizes = [8, 32], strides = [1, 1]} : vector<8x128xf32> to vector<8x32xf32>
    %46 = vector.extract_strided_slice %12 {offsets = [0, 64], sizes = [12, 32], strides = [1, 1]} : vector<12x128xf32> to vector<12x32xf32>
    %47 = vector.extract_strided_slice %14 {offsets = [0, 64], sizes = [12, 32], strides = [1, 1]} : vector<12x128xf32> to vector<12x32xf32>
    %cst_24 = arith.constant dense<0.000000e+00> : vector<8x12xf32>
    %48 = tpu.matmul %45, %46, %cst_24 {dimension_numbers = #tpu.dot_dimension_numbers<[1], [1], [0], [0], [0, 0, 1, 0], [], []>} : vector<8x32xf32>, vector<12x32xf32>, vector<8x12xf32> -> vector<8x12xf32>
    %cst_25 = arith.constant dense<0xFF800000> : vector<8xf32>
    %49 = vector.multi_reduction <maximumf>, %48, %cst_25 [1] : vector<8x12xf32> to vector<8xf32>
    %50 = vector.shape_cast %49 : vector<8xf32> to vector<8x1xf32>
    %51 = vector.broadcast %50 : vector<8x1xf32> to vector<8x12xf32>
    %52 = arith.subf %48, %51 : vector<8x12xf32>
    %53 = math.exp %52 : vector<8x12xf32>
    %cst_26 = arith.constant dense<0.000000e+00> : vector<8xf32>
    %54 = vector.multi_reduction <add>, %53, %cst_26 [1] : vector<8x12xf32> to vector<8xf32>
    %55 = vector.shape_cast %54 : vector<8xf32> to vector<8x1xf32>
    %56 = tpu.reciprocal %55 {approx = true} : vector<8x1xf32> -> vector<8x1xf32>
    %57 = vector.broadcast %56 : vector<8x1xf32> to vector<8x12xf32>
    %58 = arith.mulf %53, %57 : vector<8x12xf32>
    %cst_27 = arith.constant dense<0.000000e+00> : vector<8x32xf32>
    %59 = tpu.matmul %58, %47, %cst_27 {dimension_numbers = #tpu.dot_dimension_numbers<[1], [0], [0], [1], [0, 0, 1, 1], [], []>} : vector<8x12xf32>, vector<12x32xf32>, vector<8x32xf32> -> vector<8x32xf32>
    %60 = vector.extract_strided_slice %10 {offsets = [0, 96], sizes = [8, 32], strides = [1, 1]} : vector<8x128xf32> to vector<8x32xf32>
    %61 = vector.extract_strided_slice %12 {offsets = [0, 96], sizes = [12, 32], strides = [1, 1]} : vector<12x128xf32> to vector<12x32xf32>
    %62 = vector.extract_strided_slice %14 {offsets = [0, 96], sizes = [12, 32], strides = [1, 1]} : vector<12x128xf32> to vector<12x32xf32>
    %cst_28 = arith.constant dense<0.000000e+00> : vector<8x12xf32>
    %63 = tpu.matmul %60, %61, %cst_28 {dimension_numbers = #tpu.dot_dimension_numbers<[1], [1], [0], [0], [0, 0, 1, 0], [], []>} : vector<8x32xf32>, vector<12x32xf32>, vector<8x12xf32> -> vector<8x12xf32>
    %cst_29 = arith.constant dense<0xFF800000> : vector<8xf32>
    %64 = vector.multi_reduction <maximumf>, %63, %cst_29 [1] : vector<8x12xf32> to vector<8xf32>
    %65 = vector.shape_cast %64 : vector<8xf32> to vector<8x1xf32>
    %66 = vector.broadcast %65 : vector<8x1xf32> to vector<8x12xf32>
    %67 = arith.subf %63, %66 : vector<8x12xf32>
    %68 = math.exp %67 : vector<8x12xf32>
    %cst_30 = arith.constant dense<0.000000e+00> : vector<8xf32>
    %69 = vector.multi_reduction <add>, %68, %cst_30 [1] : vector<8x12xf32> to vector<8xf32>
    %70 = vector.shape_cast %69 : vector<8xf32> to vector<8x1xf32>
    %71 = tpu.reciprocal %70 {approx = true} : vector<8x1xf32> -> vector<8x1xf32>
    %72 = vector.broadcast %71 : vector<8x1xf32> to vector<8x12xf32>
    %73 = arith.mulf %68, %72 : vector<8x12xf32>
    %cst_31 = arith.constant dense<0.000000e+00> : vector<8x32xf32>
    %74 = tpu.matmul %73, %62, %cst_31 {dimension_numbers = #tpu.dot_dimension_numbers<[1], [0], [0], [1], [0, 0, 1, 1], [], []>} : vector<8x12xf32>, vector<12x32xf32>, vector<8x32xf32> -> vector<8x32xf32>
    %75 = tpu.concatenate %29, %44, %59, %74, %0 in 1 : vector<8x32xf32>, vector<8x32xf32>, vector<8x32xf32>, vector<8x32xf32>, vector<8x32xf32> -> vector<8x160xf32>
    %c64 = arith.constant 64 : index
    %c0_32 = arith.constant 0 : index
    %76 = vector.load %arg2[%c64, %c0_32] : memref<376x128xf32, #tpu.memory_space<vmem>>, vector<160x32xf32>
    %cst_33 = arith.constant dense<0.000000e+00> : vector<8x32xf32>
    %77 = tpu.matmul %75, %76, %cst_33 {dimension_numbers = #tpu.dot_dimension_numbers<[1], [0], [0], [1], [0, 0, 1, 1], [], []>} : vector<8x160xf32>, vector<160x32xf32>, vector<8x32xf32> -> vector<8x32xf32>
    %78 = arith.addf %77, %2 : vector<8x32xf32>
    %cst_34 = arith.constant dense<0.000000e+00> : vector<8xf32>
    %79 = vector.multi_reduction <add>, %78, %cst_34 [1] : vector<8x32xf32> to vector<8xf32>
    %80 = vector.shape_cast %79 : vector<8xf32> to vector<8x1xf32>
    %cst_35 = arith.constant 3.200000e+01 : f32
    %81 = vector.broadcast %cst_35 : f32 to vector<8x1xf32>
    %82 = arith.divf %80, %81 : vector<8x1xf32>
    %83 = vector.broadcast %82 : vector<8x1xf32> to vector<8x32xf32>
    %84 = arith.subf %78, %83 : vector<8x32xf32>
    %85 = arith.mulf %84, %84 : vector<8x32xf32>
    %cst_36 = arith.constant dense<0.000000e+00> : vector<8xf32>
    %86 = vector.multi_reduction <add>, %85, %cst_36 [1] : vector<8x32xf32> to vector<8xf32>
    %87 = vector.shape_cast %86 : vector<8xf32> to vector<8x1xf32>
    %cst_37 = arith.constant 3.200000e+01 : f32
    %88 = vector.broadcast %cst_37 : f32 to vector<8x1xf32>
    %89 = arith.divf %87, %88 : vector<8x1xf32>
    %90 = vector.broadcast %82 : vector<8x1xf32> to vector<8x32xf32>
    %91 = arith.subf %78, %90 : vector<8x32xf32>
    %cst_38 = arith.constant 9.99999974E-6 : f32
    %92 = vector.broadcast %cst_38 : f32 to vector<8x1xf32>
    %93 = arith.addf %89, %92 : vector<8x1xf32>
    %94 = math.rsqrt %93 : vector<8x1xf32>
    %95 = vector.broadcast %94 : vector<8x1xf32> to vector<8x32xf32>
    %96 = arith.mulf %91, %95 : vector<8x32xf32>
    %97 = arith.mulf %96, %3 : vector<8x32xf32>
    %98 = arith.addf %97, %4 : vector<8x32xf32>
    %c224 = arith.constant 224 : index
    %c0_39 = arith.constant 0 : index
    %99 = vector.load %arg2[%c224, %c0_39] : memref<376x128xf32, #tpu.memory_space<vmem>>, vector<32x32xf32>
    %cst_40 = arith.constant dense<0.000000e+00> : vector<8x32xf32>
    %100 = tpu.matmul %98, %99, %cst_40 {dimension_numbers = #tpu.dot_dimension_numbers<[1], [0], [0], [1], [0, 0, 1, 1], [], []>} : vector<8x32xf32>, vector<32x32xf32>, vector<8x32xf32> -> vector<8x32xf32>
    %101 = arith.addf %100, %5 : vector<8x32xf32>
    %cst_41 = arith.constant 0.000000e+00 : f32
    %102 = vector.broadcast %cst_41 : f32 to vector<8x32xf32>
    %103 = arith.maximumf %101, %102 : vector<8x32xf32>
    %c256 = arith.constant 256 : index
    %c0_42 = arith.constant 0 : index
    %104 = vector.load %arg2[%c256, %c0_42] : memref<376x128xf32, #tpu.memory_space<vmem>>, vector<32x32xf32>
    %cst_43 = arith.constant dense<0.000000e+00> : vector<8x32xf32>
    %105 = tpu.matmul %103, %104, %cst_43 {dimension_numbers = #tpu.dot_dimension_numbers<[1], [0], [0], [1], [0, 0, 1, 1], [], []>} : vector<8x32xf32>, vector<32x32xf32>, vector<8x32xf32> -> vector<8x32xf32>
    %106 = arith.addf %105, %6 : vector<8x32xf32>
    %107 = arith.addf %106, %98 : vector<8x32xf32>
    %cst_44 = arith.constant dense<0.000000e+00> : vector<8xf32>
    %108 = vector.multi_reduction <add>, %107, %cst_44 [1] : vector<8x32xf32> to vector<8xf32>
    %109 = vector.shape_cast %108 : vector<8xf32> to vector<8x1xf32>
    %cst_45 = arith.constant 3.200000e+01 : f32
    %110 = vector.broadcast %cst_45 : f32 to vector<8x1xf32>
    %111 = arith.divf %109, %110 : vector<8x1xf32>
    %112 = vector.broadcast %111 : vector<8x1xf32> to vector<8x32xf32>
    %113 = arith.subf %107, %112 : vector<8x32xf32>
    %114 = arith.mulf %113, %113 : vector<8x32xf32>
    %cst_46 = arith.constant dense<0.000000e+00> : vector<8xf32>
    %115 = vector.multi_reduction <add>, %114, %cst_46 [1] : vector<8x32xf32> to vector<8xf32>
    %116 = vector.shape_cast %115 : vector<8xf32> to vector<8x1xf32>
    %cst_47 = arith.constant 3.200000e+01 : f32
    %117 = vector.broadcast %cst_47 : f32 to vector<8x1xf32>
    %118 = arith.divf %116, %117 : vector<8x1xf32>
    %119 = vector.broadcast %111 : vector<8x1xf32> to vector<8x32xf32>
    %120 = arith.subf %107, %119 : vector<8x32xf32>
    %cst_48 = arith.constant 9.99999974E-6 : f32
    %121 = vector.broadcast %cst_48 : f32 to vector<8x1xf32>
    %122 = arith.addf %118, %121 : vector<8x1xf32>
    %123 = math.rsqrt %122 : vector<8x1xf32>
    %124 = vector.broadcast %123 : vector<8x1xf32> to vector<8x32xf32>
    %125 = arith.mulf %120, %124 : vector<8x32xf32>
    %126 = arith.mulf %125, %7 : vector<8x32xf32>
    %127 = arith.addf %126, %8 : vector<8x32xf32>
    %128 = arith.addf %127, %0 : vector<8x32xf32>
    %c288 = arith.constant 288 : index
    %c0_49 = arith.constant 0 : index
    %129 = vector.load %arg2[%c288, %c0_49] : memref<376x128xf32, #tpu.memory_space<vmem>>, vector<32x128xf32>
    %cst_50 = arith.constant dense<0.000000e+00> : vector<8x128xf32>
    %130 = tpu.matmul %128, %129, %cst_50 {dimension_numbers = #tpu.dot_dimension_numbers<[1], [0], [0], [1], [0, 0, 1, 1], [], []>} : vector<8x32xf32>, vector<32x128xf32>, vector<8x128xf32> -> vector<8x128xf32>
    %c0_51 = arith.constant 0 : index
    %c0_52 = arith.constant 0 : index
    %131 = vector.load %arg3[%c0_51, %c0_52] : memref<8x128xf32, #tpu.memory_space<vmem>>, vector<8x128xf32>
    tpu.vector_store %arg3[%c0_51, %c0_52], %130 {strides = array<i32>} : memref<8x128xf32, #tpu.memory_space<vmem>>, vector<8x128xf32>,
    return
  }
}

</mosaic_0001>

<llo_original>
// kernel: tpu_custom_call.1
$region0: #{tpu_custom_call.1}
  #allocation0 [shape = 'u32[]', space=smem, size = 0x4, offset = 0x4, fixed_abs, tag = 'smem constant byte address 0x4 - core index']
  #allocation1 [shape = 'u32[144,128]{1,0:T(1,128)}', space=vmem, size = 0x12000, scoped, tag = 'internal scratch']
  %s0 = inlined_call_operand.hbm [shape: f32[8,32], index: 0, kind: input, shape index: {}]
  %s1 = inlined_call_operand.hbm [shape: f32[12,16], index: 1, kind: input, shape index: {}]
  %s2 = inlined_call_operand.hbm [shape: f32[376,128], index: 2, kind: input, shape index: {}]
  %s3 = inlined_call_operand.hbm [shape: f32[8,128], index: 3, kind: output, shape index: {}]
  %s4 = sld [smem:[#allocation0]]
  $region34: #{tpu_custom_call.1} parent=0
    _
  %s6 = ssub.s32 1, %s4
  %s7 = scalar_select 0, %s6, %s4
  $region1: #{tpu_custom_call.1} parent=0
    #allocation2 [shape = 'u8[4096]{0}', space=vmem, size = 0x1000, scoped, tag = 'input window, operand 0, single buffered']
    #allocation3 [shape = 's32[1]{0}', space=sflag, size = 0x4, scoped, tag = 'scoped memory for tpu_custom_call.1']
    #allocation4 [shape = 's32[1]{0}', space=sflag, size = 0x4, scoped, tag = 'scoped memory for tpu_custom_call.1']
    #allocation5 [shape = 'u8[8192]{0}', space=vmem, size = 0x2000, scoped, tag = 'input window, operand 1, single buffered']
    #allocation6 [shape = 's32[1]{0}', space=sflag, size = 0x4, scoped, tag = 'scoped memory for tpu_custom_call.1']
    #allocation7 [shape = 'u8[192512]{0}', space=vmem, size = 0x2f000, scoped, tag = 'input window, operand 2, single buffered']
    #allocation8 [shape = 'u8[4096]{0}', space=vmem, size = 0x1000, scoped, tag = 'output window, operand 0, single buffered']
    %8 = vsyncpa [#allocation3], 0
    %9 = vsyncpa [#allocation6], 0
    %10 = vsyncpa [#allocation4], 0
    // Predicated region
    $region2: #{tpu_custom_call.1} parent=1 // pred_check
      _
    $region3: #{tpu_custom_call.1} parent=1 // pred_check_branch
      %12 = sbr.rel (0) target = $region5
    $region4: #{tpu_custom_call.1} parent=1 // pred_region
      %s14 = ssub.s32 128, 128
      %15 = vsyncadd [#allocation3], %s14
      %s17 = sshll.u32 [#allocation2], 4
      %s18 = int_to_ptr.vmem [resolvable:$true] %s17
      %20 = dma.hbm_to_vmem [thread:$0]  %s0, 128, %s18, [#allocation3]
    $region5: #{tpu_custom_call.1} parent=1 // pred_fallthru
      _
    // Predicated region
    $region6: #{tpu_custom_call.1} parent=1 // pred_check
      _
    $region7: #{tpu_custom_call.1} parent=1 // pred_check_branch
      %22 = sbr.rel (0) target = $region9
    $region8: #{tpu_custom_call.1} parent=1 // pred_region
      %s24 = ssub.s32 256, 256
      %25 = vsyncadd [#allocation6], %s24
      %s26 = sshll.u32 [#allocation5], 4
      %s27 = int_to_ptr.vmem [resolvable:$true] %s26
      %32 = dma.hbm_to_vmem [thread:$0]  %s1, 256, %s27, [#allocation6], 128, 128, 8
    $region9: #{tpu_custom_call.1} parent=1 // pred_fallthru
      _
    // Predicated region
    $region10: #{tpu_custom_call.1} parent=1 // pred_check
      _
    $region11: #{tpu_custom_call.1} parent=1 // pred_check_branch
      %34 = sbr.rel (0) target = $region13
    $region12: #{tpu_custom_call.1} parent=1 // pred_region
      %s36 = ssub.s32 6016, 6016
      %37 = vsyncadd [#allocation6], %s36
      %s38 = sshll.u32 [#allocation7], 4
      %s39 = int_to_ptr.vmem [resolvable:$true] %s38
      %44 = dma.hbm_to_vmem [thread:$0]  %s2, 6016, %s39, [#allocation6], 128, 128, 8
    $region13: #{tpu_custom_call.1} parent=1 // pred_fallthru
      _
    // Predicated region
    $region14: #{tpu_custom_call.1} parent=1 // pred_check
      _
    $region15: #{tpu_custom_call.1} parent=1 // pred_check_branch
      %46 = sbr.rel (0) target = $region17
    $region16: #{tpu_custom_call.1} parent=1 // pred_region
      %47 = dma.done [#allocation3], 128
    $region17: #{tpu_custom_call.1} parent=1 // pred_fallthru
      _
    // Predicated region
    $region18: #{tpu_custom_call.1} parent=1 // pred_check
      _
    $region19: #{tpu_custom_call.1} parent=1 // pred_check_branch
      %49 = sbr.rel (0) target = $region21
    $region20: #{tpu_custom_call.1} parent=1 // pred_region
      %50 = dma.done [#allocation6], 256
    $region21: #{tpu_custom_call.1} parent=1 // pred_fallthru
      _
    // Predicated region
    $region22: #{tpu_custom_call.1} parent=1 // pred_check
      _
    $region23: #{tpu_custom_call.1} parent=1 // pred_check_branch
      %52 = sbr.rel (0) target = $region25
    $region24: #{tpu_custom_call.1} parent=1 // pred_region
      %53 = dma.done [#allocation6], 6016
    $region25: #{tpu_custom_call.1} parent=1 // pred_fallthru
      _
    %v54 = vld [vmem:[#allocation2] sm:$0xff]
    %v55 = vld [vmem:[#allocation5] sm:$0xff]
    %v56 = vld [vmem:[#allocation5 + $0x8] sm:$0xf]
    %v57 = vld [vmem:[#allocation7 + $0x140] sm:$0xff]
    %v58 = vld [vmem:[#allocation7 + $0x148] sm:$0xff]
    %v59 = vld [vmem:[#allocation7 + $0x150] sm:$0xff]
    %v60 = vld [vmem:[#allocation7 + $0x158] sm:$0xff]
    %v61 = vld [vmem:[#allocation7 + $0x160] sm:$0xff]
    %v62 = vld [vmem:[#allocation7 + $0x168] sm:$0xff]
    %v63 = vld [vmem:[#allocation7 + $0x170] sm:$0xff]
    %v64 = vld [vmem:[#allocation7] sm:$0xff]
    %v65 = vld [vmem:[#allocation7 + $0x8] sm:$0xff]
    %v66 = vld [vmem:[#allocation7 + $0x10] sm:$0xff]
    %v67 = vld [vmem:[#allocation7 + $0x18] sm:$0xff]
    %vm68 = vcmask 261120
    %v70 = vsel %vm68, %v54, 0
    %72 = vmatprep.subr.mxu0 0.0
    %73 = vmatpush1.msra.mxu0 %v64
    %74 = vmatprep.subr.mxu0 0.0
    %75 = vmatpush1.msra.mxu0 %v65
    %76 = vmatprep.subr.mxu0 0.0
    %77 = vmatpush1.msra.mxu0 %v66
    %78 = vmatprep.subr.mxu0 0.0
    %79 = vmatpush1.msra.mxu0 %v67
    %80 = vmatprep.subr.mxu0 0.0
    %81 = vmatpush1.msra.mxu0 0.0
    %82 = vmatprep.subr.mxu0 0.0
    %83 = vmatpush1.msra.mxu0 0.0
    %84 = vmatprep.subr.mxu0 0.0
    %85 = vmatpush1.msra.mxu0 0.0
    %86 = vmatprep.subr.mxu0 0.0
    %87 = vmatpush1.msra.mxu0 0.0
    %88 = vmatprep.subr.mxu0 0.0
    %89 = vmatpush1.msra.mxu0 0.0
    %90 = vmatprep.subr.mxu0 0.0
    %91 = vmatpush1.msra.mxu0 0.0
    %92 = vmatprep.subr.mxu0 0.0
    %93 = vmatpush1.msra.mxu0 0.0
    %94 = vmatprep.subr.mxu0 0.0
    %95 = vmatpush1.msra.mxu0 0.0
    %96 = vmatprep.subr.mxu0 0.0
    %97 = vmatpush1.msra.mxu0 0.0
    %98 = vmatprep.subr.mxu0 0.0
    %99 = vmatpush1.msra.mxu0 0.0
    %100 = vmatprep.subr.mxu0 0.0
    %101 = vmatpush1.msra.mxu0 0.0
    %102 = vmatprep.subr.mxu0 0.0
    %103 = vmatpush1.msra.mxu0 0.0
    %104 = vmatprep.subr.mxu0 0.0
    %105 = vmatpush1.msra.mxu0 0.0
    %106 = vmatprep.subr.mxu0 0.0
    %107 = vmatpush1.msra.mxu0 0.0
    %108 = vmatprep.subr.mxu0 0.0
    %109 = vmatpush1.msra.mxu0 0.0
    %110 = vmatprep.subr.mxu0 0.0
    %111 = vmatpush1.msra.mxu0 0.0
    %112 = vmatprep.subr.mxu0 0.0
    %113 = vmatpush1.msra.mxu0 0.0
    %114 = vmatprep.subr.mxu0 0.0
    %115 = vmatpush1.msra.mxu0 0.0
    %116 = vmatprep.subr.mxu0 0.0
    %117 = vmatpush1.msra.mxu0 0.0
    %118 = vmatprep.subr.mxu0 0.0
    %119 = vmatpush1.msra.mxu0 0.0
    %120 = vmatprep.subr.mxu0 0.0
    %121 = vmatpush1.msra.mxu0 0.0
    %122 = vmatprep.subr.mxu0 0.0
    %123 = vmatpush1.msra.mxu0 0.0
    %124 = vmatprep.subr.mxu0 0.0
    %125 = vmatpush1.msra.mxu0 0.0
    %126 = vmatprep.subr.mxu0 0.0
    %127 = vmatpush1.msra.mxu0 0.0
    %128 = vmatprep.subr.mxu0 0.0
    %129 = vmatpush1.msra.mxu0 0.0
    %130 = vmatprep.subr.mxu0 0.0
    %131 = vmatpush1.msra.mxu0 0.0
    %132 = vmatprep.subr.mxu0 0.0
    %133 = vmatpush1.msra.mxu0 0.0
    %134 = vmatprep.subr.mxu0 0.0
    %135 = vmatpush1.msra.mxu0 0.0
    %136 = vmatprep.mubr.f32.mxu0 0.0
    %137 = vmatmul.mubr.f32.gmra.mrb[0].mxu0 %v70
    %v138 = vpop.f32.mrb[0].mxu0
    %v139 = vadd.f32 0.0, %v138
    %v140 = vpop.f32.mrb[0].mxu0
    %141 = vdwg.mxu0
    %v142 = vld [vmem:[#allocation7 + $0x20] sm:$0xff]
    %v143 = vld [vmem:[#allocation7 + $0x28] sm:$0xff]
    %vm144 = vcmask 130048
    %v146 = vsel %vm144, %v55, 0
    %v149 = vsel %vm144, %v56, 0
    %151 = vmatprep.subr.mxu0 0.0
    %152 = vmatpush1.msra.mxu0 %v142
    %153 = vmatprep.subr.mxu0 0.0
    %154 = vmatpush1.msra.mxu0 %v143
    %155 = vmatprep.subr.mxu0 0.0
    %156 = vmatpush1.msra.mxu0 0.0
    %157 = vmatprep.subr.mxu0 0.0
    %158 = vmatpush1.msra.mxu0 0.0
    %159 = vmatprep.subr.mxu0 0.0
    %160 = vmatpush1.msra.mxu0 0.0
    %161 = vmatprep.subr.mxu0 0.0
    %162 = vmatpush1.msra.mxu0 0.0
    %163 = vmatprep.subr.mxu0 0.0
    %164 = vmatpush1.msra.mxu0 0.0
    %165 = vmatprep.subr.mxu0 0.0
    %166 = vmatpush1.msra.mxu0 0.0
    %167 = vmatprep.subr.mxu0 0.0
    %168 = vmatpush1.msra.mxu0 0.0
    %169 = vmatprep.subr.mxu0 0.0
    %170 = vmatpush1.msra.mxu0 0.0
    %171 = vmatprep.subr.mxu0 0.0
    %172 = vmatpush1.msra.mxu0 0.0
    %173 = vmatprep.subr.mxu0 0.0
    %174 = vmatpush1.msra.mxu0 0.0
    %175 = vmatprep.subr.mxu0 0.0
    %176 = vmatpush1.msra.mxu0 0.0
    %177 = vmatprep.subr.mxu0 0.0
    %178 = vmatpush1.msra.mxu0 0.0
    %179 = vmatprep.subr.mxu0 0.0
    %180 = vmatpush1.msra.mxu0 0.0
    %181 = vmatprep.subr.mxu0 0.0
    %182 = vmatpush1.msra.mxu0 0.0
    %183 = vmatprep.subr.mxu0 0.0
    %184 = vmatpush1.msra.mxu0 0.0
    %185 = vmatprep.subr.mxu0 0.0
    %186 = vmatpush1.msra.mxu0 0.0
    %187 = vmatprep.subr.mxu0 0.0
    %188 = vmatpush1.msra.mxu0 0.0
    %189 = vmatprep.subr.mxu0 0.0
    %190 = vmatpush1.msra.mxu0 0.0
    %191 = vmatprep.subr.mxu0 0.0
    %192 = vmatpush1.msra.mxu0 0.0
    %193 = vmatprep.subr.mxu0 0.0
    %194 = vmatpush1.msra.mxu0 0.0
    %195 = vmatprep.subr.mxu0 0.0
    %196 = vmatpush1.msra.mxu0 0.0
    %197 = vmatprep.subr.mxu0 0.0
    %198 = vmatpush1.msra.mxu0 0.0
    %199 = vmatprep.subr.mxu0 0.0
    %200 = vmatpush1.msra.mxu0 0.0
    %201 = vmatprep.subr.mxu0 0.0
    %202 = vmatpush1.msra.mxu0 0.0
    %203 = vmatprep.subr.mxu0 0.0
    %204 = vmatpush1.msra.mxu0 0.0
    %205 = vmatprep.subr.mxu0 0.0
    %206 = vmatpush1.msra.mxu0 0.0
    %207 = vmatprep.subr.mxu0 0.0
    %208 = vmatpush1.msra.mxu0 0.0
    %209 = vmatprep.subr.mxu0 0.0
    %210 = vmatpush1.msra.mxu0 0.0
    %211 = vmatprep.subr.mxu0 0.0
    %212 = vmatpush1.msra.mxu0 0.0
    %213 = vmatprep.subr.mxu0 0.0
    %214 = vmatpush1.msra.mxu0 0.0
    %215 = vmatprep.mubr.f32.mxu0 0.0
    %216 = vmatmul.mubr.f32.gmra.mrb[0].mxu0 %v146
    %v217 = vpop.f32.mrb[0].mxu0
    %v218 = vadd.f32 0.0, %v217
    %v219 = vpop.f32.mrb[0].mxu0
    %220 = vmatprep.mubr.f32.mxu0 0.0
    %221 = vmatmul.mubr.f32.gmra.mrb[0].mxu0 %v149
    %v222 = vpop.f32.mrb[0].mxu0
    %v223 = vadd.f32 0.0, %v222
    %v224 = vpop.f32.mrb[0].mxu0
    %225 = vdwg.mxu0
    %v226 = vld [vmem:[#allocation7 + $0x30] sm:$0xff]
    %v227 = vld [vmem:[#allocation7 + $0x38] sm:$0xff]
    %228 = vmatprep.subr.mxu0 0.0
    %229 = vmatpush1.msra.mxu0 %v226
    %230 = vmatprep.subr.mxu0 0.0
    %231 = vmatpush1.msra.mxu0 %v227
    %232 = vmatprep.subr.mxu0 0.0
    %233 = vmatpush1.msra.mxu0 0.0
    %234 = vmatprep.subr.mxu0 0.0
    %235 = vmatpush1.msra.mxu0 0.0
    %236 = vmatprep.subr.mxu0 0.0
    %237 = vmatpush1.msra.mxu0 0.0
    %238 = vmatprep.subr.mxu0 0.0
    %239 = vmatpush1.msra.mxu0 0.0
    %240 = vmatprep.subr.mxu0 0.0
    %241 = vmatpush1.msra.mxu0 0.0
    %242 = vmatprep.subr.mxu0 0.0
    %243 = vmatpush1.msra.mxu0 0.0
    %244 = vmatprep.subr.mxu0 0.0
    %245 = vmatpush1.msra.mxu0 0.0
    %246 = vmatprep.subr.mxu0 0.0
    %247 = vmatpush1.msra.mxu0 0.0
    %248 = vmatprep.subr.mxu0 0.0
    %249 = vmatpush1.msra.mxu0 0.0
    %250 = vmatprep.subr.mxu0 0.0
    %251 = vmatpush1.msra.mxu0 0.0
    %252 = vmatprep.subr.mxu0 0.0
    %253 = vmatpush1.msra.mxu0 0.0
    %254 = vmatprep.subr.mxu0 0.0
    %255 = vmatpush1.msra.mxu0 0.0
    %256 = vmatprep.subr.mxu0 0.0
    %257 = vmatpush1.msra.mxu0 0.0
    %258 = vmatprep.subr.mxu0 0.0
    %259 = vmatpush1.msra.mxu0 0.0
    %260 = vmatprep.subr.mxu0 0.0
    %261 = vmatpush1.msra.mxu0 0.0
    %262 = vmatprep.subr.mxu0 0.0
    %263 = vmatpush1.msra.mxu0 0.0
    %264 = vmatprep.subr.mxu0 0.0
    %265 = vmatpush1.msra.mxu0 0.0
    %266 = vmatprep.subr.mxu0 0.0
    %267 = vmatpush1.msra.mxu0 0.0
    %268 = vmatprep.subr.mxu0 0.0
    %269 = vmatpush1.msra.mxu0 0.0
    %270 = vmatprep.subr.mxu0 0.0
    %271 = vmatpush1.msra.mxu0 0.0
    %272 = vmatprep.subr.mxu0 0.0
    %273 = vmatpush1.msra.mxu0 0.0
    %274 = vmatprep.subr.mxu0 0.0
    %275 = vmatpush1.msra.mxu0 0.0
    %276 = vmatprep.subr.mxu0 0.0
    %277 = vmatpush1.msra.mxu0 0.0
    %278 = vmatprep.subr.mxu0 0.0
    %279 = vmatpush1.msra.mxu0 0.0
    %280 = vmatprep.subr.mxu0 0.0
    %281 = vmatpush1.msra.mxu0 0.0
    %282 = vmatprep.subr.mxu0 0.0
    %283 = vmatpush1.msra.mxu0 0.0
    %284 = vmatprep.subr.mxu0 0.0
    %285 = vmatpush1.msra.mxu0 0.0
    %286 = vmatprep.subr.mxu0 0.0
    %287 = vmatpush1.msra.mxu0 0.0
    %288 = vmatprep.subr.mxu0 0.0
    %289 = vmatpush1.msra.mxu0 0.0
    %290 = vmatprep.subr.mxu0 0.0
    %291 = vmatpush1.msra.mxu0 0.0
    %292 = vmatprep.mubr.f32.mxu0 0.0
    %293 = vmatmul.mubr.f32.gmra.mrb[0].mxu0 %v146
    %v294 = vpop.f32.mrb[0].mxu0
    %v295 = vadd.f32 0.0, %v294
    %v296 = vpop.f32.mrb[0].mxu0
    %297 = vmatprep.mubr.f32.mxu0 0.0
    %298 = vmatmul.mubr.f32.gmra.mrb[0].mxu0 %v149
    %v299 = vpop.f32.mrb[0].mxu0
    %v300 = vadd.f32 0.0, %v299
    %v301 = vpop.f32.mrb[0].mxu0
    %302 = vdwg.mxu0
    %v304 = vsel %vm68, %v139, 0
    %v307 = vsel %vm68, %v218, 0
    %v310 = vsel %vm68, %v223, 0
    %312 = vmatprep.subr.mxu0 0.0
    %313 = vmatpush1.xpose.msra.mxu0 %v307
    %314 = vmatprep.subr.mxu0 0.0
    %315 = vmatpush1.xpose.msra.mxu0 %v310
    %316 = vmatprep.subr.mxu0 0.0
    %317 = vmatpush1.xpose.msra.mxu0 0.0
    %318 = vmatprep.subr.mxu0 0.0
    %319 = vmatpush1.xpose.msra.mxu0 0.0
    %320 = vmatprep.subr.mxu0 0.0
    %321 = vmatpush1.xpose.msra.mxu0 0.0
    %322 = vmatprep.subr.mxu0 0.0
    %323 = vmatpush1.xpose.msra.mxu0 0.0
    %324 = vmatprep.subr.mxu0 0.0
    %325 = vmatpush1.xpose.msra.mxu0 0.0
    %326 = vmatprep.subr.mxu0 0.0
    %327 = vmatpush1.xpose.msra.mxu0 0.0
    %328 = vmatprep.subr.mxu0 0.0
    %329 = vmatpush1.xpose.msra.mxu0 0.0
    %330 = vmatprep.subr.mxu0 0.0
    %331 = vmatpush1.xpose.msra.mxu0 0.0
    %332 = vmatprep.subr.mxu0 0.0
    %333 = vmatpush1.xpose.msra.mxu0 0.0
    %334 = vmatprep.subr.mxu0 0.0
    %335 = vmatpush1.xpose.msra.mxu0 0.0
    %336 = vmatprep.subr.mxu0 0.0
    %337 = vmatpush1.xpose.msra.mxu0 0.0
    %338 = vmatprep.subr.mxu0 0.0
    %339 = vmatpush1.xpose.msra.mxu0 0.0
    %340 = vmatprep.subr.mxu0 0.0
    %341 = vmatpush1.xpose.msra.mxu0 0.0
    %342 = vmatprep.subr.mxu0 0.0
    %343 = vmatpush1.xpose.msra.mxu0 0.0
    %344 = vmatprep.subr.mxu0 0.0
    %345 = vmatpush1.xpose.msra.mxu0 0.0
    %346 = vmatprep.subr.mxu0 0.0
    %347 = vmatpush1.xpose.msra.mxu0 0.0
    %348 = vmatprep.subr.mxu0 0.0
    %349 = vmatpush1.xpose.msra.mxu0 0.0
    %350 = vmatprep.subr.mxu0 0.0
    %351 = vmatpush1.xpose.msra.mxu0 0.0
    %352 = vmatprep.subr.mxu0 0.0
    %353 = vmatpush1.xpose.msra.mxu0 0.0
    %354 = vmatprep.subr.mxu0 0.0
    %355 = vmatpush1.xpose.msra.mxu0 0.0
    %356 = vmatprep.subr.mxu0 0.0
    %357 = vmatpush1.xpose.msra.mxu0 0.0
    %358 = vmatprep.subr.mxu0 0.0
    %359 = vmatpush1.xpose.msra.mxu0 0.0
    %360 = vmatprep.subr.mxu0 0.0
    %361 = vmatpush1.xpose.msra.mxu0 0.0
    %362 = vmatprep.subr.mxu0 0.0
    %363 = vmatpush1.xpose.msra.mxu0 0.0
    %364 = vmatprep.subr.mxu0 0.0
    %365 = vmatpush1.xpose.msra.mxu0 0.0
    %366 = vmatprep.subr.mxu0 0.0
    %367 = vmatpush1.xpose.msra.mxu0 0.0
    %368 = vmatprep.subr.mxu0 0.0
    %369 = vmatpush1.xpose.msra.mxu0 0.0
    %370 = vmatprep.subr.mxu0 0.0
    %371 = vmatpush1.xpose.msra.mxu0 0.0
    %372 = vmatprep.subr.mxu0 0.0
    %373 = vmatpush1.xpose.msra.mxu0 0.0
    %374 = vmatprep.subr.mxu0 0.0
    %375 = vmatpush1.xpose.msra.mxu0 0.0
    %376 = vmatprep.mubr.f32.mxu0 0.0
    %377 = vmatmul.mubr.f32.gmra.mrb[0].mxu0 %v304
    %v378 = vpop.f32.mrb[0].mxu0
    %v379 = vadd.f32 0.0, %v378
    %v380 = vpop.f32.mrb[0].mxu0
    %381 = vdwg.mxu0
    %vm382 = vcmask 97280
    %v383 = vsel %vm382, %v379, -inf
    %384 = vmax.xlane.f32.xlu0 %v383
    %v385 = vpop.xlane.xlu0 %384
    %v386 = vsub.f32 %v379, %v385
    %v387 = vmul.f32 %v386, 1.442695
    %v388 = vpow.pop %v387
    %v389 = vsel %vm382, %v388, 0.0
    %390 = vadd.xlane.f32.xlu0 %v389
    %v391 = vpop.xlane.xlu0 %390
    %v392 = vrcp.pop %v391
    %v393 = vmul.f32 %v388, %v392
    %v395 = vsel %vm382, %v393, 0
    %vm397 = vcmask 1043456
    %v399 = vsel %vm397, %v300, 0
    %401 = vmatprep.subr.mxu0 0.0
    %402 = vmatpush1.msra.mxu0 %v295
    %403 = vmatprep.subr.mxu0 0.0
    %404 = vmatpush1.msra.mxu0 %v399
    %405 = vmatprep.subr.mxu0 0.0
    %406 = vmatpush1.msra.mxu0 0.0
    %407 = vmatprep.subr.mxu0 0.0
    %408 = vmatpush1.msra.mxu0 0.0
    %409 = vmatprep.subr.mxu0 0.0
    %410 = vmatpush1.msra.mxu0 0.0
    %411 = vmatprep.subr.mxu0 0.0
    %412 = vmatpush1.msra.mxu0 0.0
    %413 = vmatprep.subr.mxu0 0.0
    %414 = vmatpush1.msra.mxu0 0.0
    %415 = vmatprep.subr.mxu0 0.0
    %416 = vmatpush1.msra.mxu0 0.0
    %417 = vmatprep.subr.mxu0 0.0
    %418 = vmatpush1.msra.mxu0 0.0
    %419 = vmatprep.subr.mxu0 0.0
    %420 = vmatpush1.msra.mxu0 0.0
    %421 = vmatprep.subr.mxu0 0.0
    %422 = vmatpush1.msra.mxu0 0.0
    %423 = vmatprep.subr.mxu0 0.0
    %424 = vmatpush1.msra.mxu0 0.0
    %425 = vmatprep.subr.mxu0 0.0
    %426 = vmatpush1.msra.mxu0 0.0
    %427 = vmatprep.subr.mxu0 0.0
    %428 = vmatpush1.msra.mxu0 0.0
    %429 = vmatprep.subr.mxu0 0.0
    %430 = vmatpush1.msra.mxu0 0.0
    %431 = vmatprep.subr.mxu0 0.0
    %432 = vmatpush1.msra.mxu0 0.0
    %433 = vmatprep.subr.mxu0 0.0
    %434 = vmatpush1.msra.mxu0 0.0
    %435 = vmatprep.subr.mxu0 0.0
    %436 = vmatpush1.msra.mxu0 0.0
    %437 = vmatprep.subr.mxu0 0.0
    %438 = vmatpush1.msra.mxu0 0.0
    %439 = vmatprep.subr.mxu0 0.0
    %440 = vmatpush1.msra.mxu0 0.0
    %441 = vmatprep.subr.mxu0 0.0
    %442 = vmatpush1.msra.mxu0 0.0
    %443 = vmatprep.subr.mxu0 0.0
    %444 = vmatpush1.msra.mxu0 0.0
    %445 = vmatprep.subr.mxu0 0.0
    %446 = vmatpush1.msra.mxu0 0.0
    %447 = vmatprep.subr.mxu0 0.0
    %448 = vmatpush1.msra.mxu0 0.0
    %449 = vmatprep.subr.mxu0 0.0
    %450 = vmatpush1.msra.mxu0 0.0
    %451 = vmatprep.subr.mxu0 0.0
    %452 = vmatpush1.msra.mxu0 0.0
    %453 = vmatprep.subr.mxu0 0.0
    %454 = vmatpush1.msra.mxu0 0.0
    %455 = vmatprep.subr.mxu0 0.0
    %456 = vmatpush1.msra.mxu0 0.0
    %457 = vmatprep.subr.mxu0 0.0
    %458 = vmatpush1.msra.mxu0 0.0
    %459 = vmatprep.subr.mxu0 0.0
    %460 = vmatpush1.msra.mxu0 0.0
    %461 = vmatprep.subr.mxu0 0.0
    %462 = vmatpush1.msra.mxu0 0.0
    %463 = vmatprep.subr.mxu0 0.0
    %464 = vmatpush1.msra.mxu0 0.0
    %465 = vmatprep.mubr.f32.mxu0 0.0
    %466 = vmatmul.mubr.f32.gmra.mrb[0].mxu0 %v395
    %v467 = vpop.f32.mrb[0].mxu0
    %v468 = vadd.f32 0.0, %v467
    %v469 = vpop.f32.mrb[0].mxu0
    %470 = vdwg.mxu0
    %471 = vrot.lane.b32.xlu0 %v139, 96
    %v472 = vpop.permute.xlu0 %471
    %473 = vrot.lane.b32.xlu0 %v218, 96
    %v474 = vpop.permute.xlu0 %473
    %475 = vrot.lane.b32.xlu0 %v223, 96
    %v476 = vpop.permute.xlu0 %475
    %v477 = vsel %vm68, %v472, 0
    %v479 = vsel %vm68, %v474, 0
    %v481 = vsel %vm68, %v476, 0
    %483 = vmatprep.subr.mxu0 0.0
    %484 = vmatpush1.xpose.msra.mxu0 %v479
    %485 = vmatprep.subr.mxu0 0.0
    %486 = vmatpush1.xpose.msra.mxu0 %v481
    %487 = vmatprep.subr.mxu0 0.0
    %488 = vmatpush1.xpose.msra.mxu0 0.0
    %489 = vmatprep.subr.mxu0 0.0
    %490 = vmatpush1.xpose.msra.mxu0 0.0
    %491 = vmatprep.subr.mxu0 0.0
    %492 = vmatpush1.xpose.msra.mxu0 0.0
    %493 = vmatprep.subr.mxu0 0.0
    %494 = vmatpush1.xpose.msra.mxu0 0.0
    %495 = vmatprep.subr.mxu0 0.0
    %496 = vmatpush1.xpose.msra.mxu0 0.0
    %497 = vmatprep.subr.mxu0 0.0
    %498 = vmatpush1.xpose.msra.mxu0 0.0
    %499 = vmatprep.subr.mxu0 0.0
    %500 = vmatpush1.xpose.msra.mxu0 0.0
    %501 = vmatprep.subr.mxu0 0.0
    %502 = vmatpush1.xpose.msra.mxu0 0.0
    %503 = vmatprep.subr.mxu0 0.0
    %504 = vmatpush1.xpose.msra.mxu0 0.0
    %505 = vmatprep.subr.mxu0 0.0
    %506 = vmatpush1.xpose.msra.mxu0 0.0
    %507 = vmatprep.subr.mxu0 0.0
    %508 = vmatpush1.xpose.msra.mxu0 0.0
    %509 = vmatprep.subr.mxu0 0.0
    %510 = vmatpush1.xpose.msra.mxu0 0.0
    %511 = vmatprep.subr.mxu0 0.0
    %512 = vmatpush1.xpose.msra.mxu0 0.0
    %513 = vmatprep.subr.mxu0 0.0
    %514 = vmatpush1.xpose.msra.mxu0 0.0
    %515 = vmatprep.subr.mxu0 0.0
    %516 = vmatpush1.xpose.msra.mxu0 0.0
    %517 = vmatprep.subr.mxu0 0.0
    %518 = vmatpush1.xpose.msra.mxu0 0.0
    %519 = vmatprep.subr.mxu0 0.0
    %520 = vmatpush1.xpose.msra.mxu0 0.0
    %521 = vmatprep.subr.mxu0 0.0
    %522 = vmatpush1.xpose.msra.mxu0 0.0
    %523 = vmatprep.subr.mxu0 0.0
    %524 = vmatpush1.xpose.msra.mxu0 0.0
    %525 = vmatprep.subr.mxu0 0.0
    %526 = vmatpush1.xpose.msra.mxu0 0.0
    %527 = vmatprep.subr.mxu0 0.0
    %528 = vmatpush1.xpose.msra.mxu0 0.0
    %529 = vmatprep.subr.mxu0 0.0
    %530 = vmatpush1.xpose.msra.mxu0 0.0
    %531 = vmatprep.subr.mxu0 0.0
    %532 = vmatpush1.xpose.msra.mxu0 0.0
    %533 = vmatprep.subr.mxu0 0.0
    %534 = vmatpush1.xpose.msra.mxu0 0.0
    %535 = vmatprep.subr.mxu0 0.0
    %536 = vmatpush1.xpose.msra.mxu0 0.0
    %537 = vmatprep.subr.mxu0 0.0
    %538 = vmatpush1.xpose.msra.mxu0 0.0
    %539 = vmatprep.subr.mxu0 0.0
    %540 = vmatpush1.xpose.msra.mxu0 0.0
    %541 = vmatprep.subr.mxu0 0.0
    %542 = vmatpush1.xpose.msra.mxu0 0.0
    %543 = vmatprep.subr.mxu0 0.0
    %544 = vmatpush1.xpose.msra.mxu0 0.0
    %545 = vmatprep.subr.mxu0 0.0
    %546 = vmatpush1.xpose.msra.mxu0 0.0
    %547 = vmatprep.mubr.f32.mxu0 0.0
    %548 = vmatmul.mubr.f32.gmra.mrb[0].mxu0 %v477
    %v549 = vpop.f32.mrb[0].mxu0
    %v550 = vadd.f32 0.0, %v549
    %v551 = vpop.f32.mrb[0].mxu0
    %552 = vdwg.mxu0
    %v553 = vsel %vm382, %v550, -inf
    %554 = vmax.xlane.f32.xlu0 %v553
    %v555 = vpop.xlane.xlu0 %554
    %v556 = vsub.f32 %v550, %v555
    %v557 = vmul.f32 %v556, 1.442695
    %v558 = vpow.pop %v557
    %v559 = vsel %vm382, %v558, 0.0
    %560 = vadd.xlane.f32.xlu0 %v559
    %v561 = vpop.xlane.xlu0 %560
    %v562 = vrcp.pop %v561
    %v563 = vmul.f32 %v558, %v562
    %565 = vrot.lane.b32.xlu0 %v295, 96
    %v566 = vpop.permute.xlu0 %565
    %567 = vrot.lane.b32.xlu0 %v300, 96
    %v568 = vpop.permute.xlu0 %567
    %v571 = vsel %vm382, %v563, 0
    %v573 = vsel %vm397, %v568, 0
    %575 = vmatprep.subr.mxu0 0.0
    %576 = vmatpush1.msra.mxu0 %v566
    %577 = vmatprep.subr.mxu0 0.0
    %578 = vmatpush1.msra.mxu0 %v573
    %579 = vmatprep.subr.mxu0 0.0
    %580 = vmatpush1.msra.mxu0 0.0
    %581 = vmatprep.subr.mxu0 0.0
    %582 = vmatpush1.msra.mxu0 0.0
    %583 = vmatprep.subr.mxu0 0.0
    %584 = vmatpush1.msra.mxu0 0.0
    %585 = vmatprep.subr.mxu0 0.0
    %586 = vmatpush1.msra.mxu0 0.0
    %587 = vmatprep.subr.mxu0 0.0
    %588 = vmatpush1.msra.mxu0 0.0
    %589 = vmatprep.subr.mxu0 0.0
    %590 = vmatpush1.msra.mxu0 0.0
    %591 = vmatprep.subr.mxu0 0.0
    %592 = vmatpush1.msra.mxu0 0.0
    %593 = vmatprep.subr.mxu0 0.0
    %594 = vmatpush1.msra.mxu0 0.0
    %595 = vmatprep.subr.mxu0 0.0
    %596 = vmatpush1.msra.mxu0 0.0
    %597 = vmatprep.subr.mxu0 0.0
    %598 = vmatpush1.msra.mxu0 0.0
    %599 = vmatprep.subr.mxu0 0.0
    %600 = vmatpush1.msra.mxu0 0.0
    %601 = vmatprep.subr.mxu0 0.0
    %602 = vmatpush1.msra.mxu0 0.0
    %603 = vmatprep.subr.mxu0 0.0
    %604 = vmatpush1.msra.mxu0 0.0
    %605 = vmatprep.subr.mxu0 0.0
    %606 = vmatpush1.msra.mxu0 0.0
    %607 = vmatprep.subr.mxu0 0.0
    %608 = vmatpush1.msra.mxu0 0.0
    %609 = vmatprep.subr.mxu0 0.0
    %610 = vmatpush1.msra.mxu0 0.0
    %611 = vmatprep.subr.mxu0 0.0
    %612 = vmatpush1.msra.mxu0 0.0
    %613 = vmatprep.subr.mxu0 0.0
    %614 = vmatpush1.msra.mxu0 0.0
    %615 = vmatprep.subr.mxu0 0.0
    %616 = vmatpush1.msra.mxu0 0.0
    %617 = vmatprep.subr.mxu0 0.0
    %618 = vmatpush1.msra.mxu0 0.0
    %619 = vmatprep.subr.mxu0 0.0
    %620 = vmatpush1.msra.mxu0 0.0
    %621 = vmatprep.subr.mxu0 0.0
    %622 = vmatpush1.msra.mxu0 0.0
    %623 = vmatprep.subr.mxu0 0.0
    %624 = vmatpush1.msra.mxu0 0.0
    %625 = vmatprep.subr.mxu0 0.0
    %626 = vmatpush1.msra.mxu0 0.0
    %627 = vmatprep.subr.mxu0 0.0
    %628 = vmatpush1.msra.mxu0 0.0
    %629 = vmatprep.subr.mxu0 0.0
    %630 = vmatpush1.msra.mxu0 0.0
    %631 = vmatprep.subr.mxu0 0.0
    %632 = vmatpush1.msra.mxu0 0.0
    %633 = vmatprep.subr.mxu0 0.0
    %634 = vmatpush1.msra.mxu0 0.0
    %635 = vmatprep.subr.mxu0 0.0
    %636 = vmatpush1.msra.mxu0 0.0
    %637 = vmatprep.subr.mxu0 0.0
    %638 = vmatpush1.msra.mxu0 0.0
    %639 = vmatprep.mubr.f32.mxu0 0.0
    %640 = vmatmul.mubr.f32.gmra.mrb[0].mxu0 %v571
    %v641 = vpop.f32.mrb[0].mxu0
    %v642 = vadd.f32 0.0, %v641
    %v643 = vpop.f32.mrb[0].mxu0
    %644 = vdwg.mxu0
    %645 = vrot.lane.b32.xlu0 %v139, 64
    %v646 = vpop.permute.xlu0 %645
    %647 = vrot.lane.b32.xlu0 %v218, 64
    %v648 = vpop.permute.xlu0 %647
    %649 = vrot.lane.b32.xlu0 %v223, 64
    %v650 = vpop.permute.xlu0 %649
    %v651 = vsel %vm68, %v646, 0
    %v653 = vsel %vm68, %v648, 0
    %v655 = vsel %vm68, %v650, 0
    %657 = vmatprep.subr.mxu0 0.0
    %658 = vmatpush1.xpose.msra.mxu0 %v653
    %659 = vmatprep.subr.mxu0 0.0
    %660 = vmatpush1.xpose.msra.mxu0 %v655
    %661 = vmatprep.subr.mxu0 0.0
    %662 = vmatpush1.xpose.msra.mxu0 0.0
    %663 = vmatprep.subr.mxu0 0.0
    %664 = vmatpush1.xpose.msra.mxu0 0.0
    %665 = vmatprep.subr.mxu0 0.0
    %666 = vmatpush1.xpose.msra.mxu0 0.0
    %667 = vmatprep.subr.mxu0 0.0
    %668 = vmatpush1.xpose.msra.mxu0 0.0
    %669 = vmatprep.subr.mxu0 0.0
    %670 = vmatpush1.xpose.msra.mxu0 0.0
    %671 = vmatprep.subr.mxu0 0.0
    %672 = vmatpush1.xpose.msra.mxu0 0.0
    %673 = vmatprep.subr.mxu0 0.0
    %674 = vmatpush1.xpose.msra.mxu0 0.0
    %675 = vmatprep.subr.mxu0 0.0
    %676 = vmatpush1.xpose.msra.mxu0 0.0
    %677 = vmatprep.subr.mxu0 0.0
    %678 = vmatpush1.xpose.msra.mxu0 0.0
    %679 = vmatprep.subr.mxu0 0.0
    %680 = vmatpush1.xpose.msra.mxu0 0.0
    %681 = vmatprep.subr.mxu0 0.0
    %682 = vmatpush1.xpose.msra.mxu0 0.0
    %683 = vmatprep.subr.mxu0 0.0
    %684 = vmatpush1.xpose.msra.mxu0 0.0
    %685 = vmatprep.subr.mxu0 0.0
    %686 = vmatpush1.xpose.msra.mxu0 0.0
    %687 = vmatprep.subr.mxu0 0.0
    %688 = vmatpush1.xpose.msra.mxu0 0.0
    %689 = vmatprep.subr.mxu0 0.0
    %690 = vmatpush1.xpose.msra.mxu0 0.0
    %691 = vmatprep.subr.mxu0 0.0
    %692 = vmatpush1.xpose.msra.mxu0 0.0
    %693 = vmatprep.subr.mxu0 0.0
    %694 = vmatpush1.xpose.msra.mxu0 0.0
    %695 = vmatprep.subr.mxu0 0.0
    %696 = vmatpush1.xpose.msra.mxu0 0.0
    %697 = vmatprep.subr.mxu0 0.0
    %698 = vmatpush1.xpose.msra.mxu0 0.0
    %699 = vmatprep.subr.mxu0 0.0
    %700 = vmatpush1.xpose.msra.mxu0 0.0
    %701 = vmatprep.subr.mxu0 0.0
    %702 = vmatpush1.xpose.msra.mxu0 0.0
    %703 = vmatprep.subr.mxu0 0.0
    %704 = vmatpush1.xpose.msra.mxu0 0.0
    %705 = vmatprep.subr.mxu0 0.0
    %706 = vmatpush1.xpose.msra.mxu0 0.0
    %707 = vmatprep.subr.mxu0 0.0
    %708 = vmatpush1.xpose.msra.mxu0 0.0
    %709 = vmatprep.subr.mxu0 0.0
    %710 = vmatpush1.xpose.msra.mxu0 0.0
    %711 = vmatprep.subr.mxu0 0.0
    %712 = vmatpush1.xpose.msra.mxu0 0.0
    %713 = vmatprep.subr.mxu0 0.0
    %714 = vmatpush1.xpose.msra.mxu0 0.0
    %715 = vmatprep.subr.mxu0 0.0
    %716 = vmatpush1.xpose.msra.mxu0 0.0
    %717 = vmatprep.subr.mxu0 0.0
    %718 = vmatpush1.xpose.msra.mxu0 0.0
    %719 = vmatprep.subr.mxu0 0.0
    %720 = vmatpush1.xpose.msra.mxu0 0.0
    %721 = vmatprep.mubr.f32.mxu0 0.0
    %722 = vmatmul.mubr.f32.gmra.mrb[0].mxu0 %v651
    %v723 = vpop.f32.mrb[0].mxu0
    %v724 = vadd.f32 0.0, %v723
    %v725 = vpop.f32.mrb[0].mxu0
    %726 = vdwg.mxu0
    %v727 = vsel %vm382, %v724, -inf
    %728 = vmax.xlane.f32.xlu0 %v727
    %v729 = vpop.xlane.xlu0 %728
    %v730 = vsub.f32 %v724, %v729
    %v731 = vmul.f32 %v730, 1.442695
    %v732 = vpow.pop %v731
    %v733 = vsel %vm382, %v732, 0.0
    %734 = vadd.xlane.f32.xlu0 %v733
    %v735 = vpop.xlane.xlu0 %734
    %v736 = vrcp.pop %v735
    %v737 = vmul.f32 %v732, %v736
    %738 = vrot.lane.b32.xlu0 %v295, 64
    %v739 = vpop.permute.xlu0 %738
    %740 = vrot.lane.b32.xlu0 %v300, 64
    %v741 = vpop.permute.xlu0 %740
    %v744 = vsel %vm382, %v737, 0
    %v746 = vsel %vm397, %v741, 0
    %748 = vmatprep.subr.mxu0 0.0
    %749 = vmatpush1.msra.mxu0 %v739
    %750 = vmatprep.subr.mxu0 0.0
    %751 = vmatpush1.msra.mxu0 %v746
    %752 = vmatprep.subr.mxu0 0.0
    %753 = vmatpush1.msra.mxu0 0.0
    %754 = vmatprep.subr.mxu0 0.0
    %755 = vmatpush1.msra.mxu0 0.0
    %756 = vmatprep.subr.mxu0 0.0
    %757 = vmatpush1.msra.mxu0 0.0
    %758 = vmatprep.subr.mxu0 0.0
    %759 = vmatpush1.msra.mxu0 0.0
    %760 = vmatprep.subr.mxu0 0.0
    %761 = vmatpush1.msra.mxu0 0.0
    %762 = vmatprep.subr.mxu0 0.0
    %763 = vmatpush1.msra.mxu0 0.0
    %764 = vmatprep.subr.mxu0 0.0
    %765 = vmatpush1.msra.mxu0 0.0
    %766 = vmatprep.subr.mxu0 0.0
    %767 = vmatpush1.msra.mxu0 0.0
    %768 = vmatprep.subr.mxu0 0.0
    %769 = vmatpush1.msra.mxu0 0.0
    %770 = vmatprep.subr.mxu0 0.0
    %771 = vmatpush1.msra.mxu0 0.0
    %772 = vmatprep.subr.mxu0 0.0
    %773 = vmatpush1.msra.mxu0 0.0
    %774 = vmatprep.subr.mxu0 0.0
    %775 = vmatpush1.msra.mxu0 0.0
    %776 = vmatprep.subr.mxu0 0.0
    %777 = vmatpush1.msra.mxu0 0.0
    %778 = vmatprep.subr.mxu0 0.0
    %779 = vmatpush1.msra.mxu0 0.0
    %780 = vmatprep.subr.mxu0 0.0
    %781 = vmatpush1.msra.mxu0 0.0
    %782 = vmatprep.subr.mxu0 0.0
    %783 = vmatpush1.msra.mxu0 0.0
    %784 = vmatprep.subr.mxu0 0.0
    %785 = vmatpush1.msra.mxu0 0.0
    %786 = vmatprep.subr.mxu0 0.0
    %787 = vmatpush1.msra.mxu0 0.0
    %788 = vmatprep.subr.mxu0 0.0
    %789 = vmatpush1.msra.mxu0 0.0
    %790 = vmatprep.subr.mxu0 0.0
    %791 = vmatpush1.msra.mxu0 0.0
    %792 = vmatprep.subr.mxu0 0.0
    %793 = vmatpush1.msra.mxu0 0.0
    %794 = vmatprep.subr.mxu0 0.0
    %795 = vmatpush1.msra.mxu0 0.0
    %796 = vmatprep.subr.mxu0 0.0
    %797 = vmatpush1.msra.mxu0 0.0
    %798 = vmatprep.subr.mxu0 0.0
    %799 = vmatpush1.msra.mxu0 0.0
    %800 = vmatprep.subr.mxu0 0.0
    %801 = vmatpush1.msra.mxu0 0.0
    %802 = vmatprep.subr.mxu0 0.0
    %803 = vmatpush1.msra.mxu0 0.0
    %804 = vmatprep.subr.mxu0 0.0
    %805 = vmatpush1.msra.mxu0 0.0
    %806 = vmatprep.subr.mxu0 0.0
    %807 = vmatpush1.msra.mxu0 0.0
    %808 = vmatprep.subr.mxu0 0.0
    %809 = vmatpush1.msra.mxu0 0.0
    %810 = vmatprep.subr.mxu0 0.0
    %811 = vmatpush1.msra.mxu0 0.0
    %812 = vmatprep.mubr.f32.mxu0 0.0
    %813 = vmatmul.mubr.f32.gmra.mrb[0].mxu0 %v744
    %v814 = vpop.f32.mrb[0].mxu0
    %v815 = vadd.f32 0.0, %v814
    %v816 = vpop.f32.mrb[0].mxu0
    %817 = vdwg.mxu0
    %818 = vrot.lane.b32.xlu0 %v139, 32
    %v819 = vpop.permute.xlu0 %818
    %820 = vrot.lane.b32.xlu0 %v218, 32
    %v821 = vpop.permute.xlu0 %820
    %822 = vrot.lane.b32.xlu0 %v223, 32
    %v823 = vpop.permute.xlu0 %822
    %v824 = vsel %vm68, %v819, 0
    %v826 = vsel %vm68, %v821, 0
    %v828 = vsel %vm68, %v823, 0
    %830 = vmatprep.subr.mxu0 0.0
    %831 = vmatpush1.xpose.msra.mxu0 %v826
    %832 = vmatprep.subr.mxu0 0.0
    %833 = vmatpush1.xpose.msra.mxu0 %v828
    %834 = vmatprep.subr.mxu0 0.0
    %835 = vmatpush1.xpose.msra.mxu0 0.0
    %836 = vmatprep.subr.mxu0 0.0
    %837 = vmatpush1.xpose.msra.mxu0 0.0
    %838 = vmatprep.subr.mxu0 0.0
    %839 = vmatpush1.xpose.msra.mxu0 0.0
    %840 = vmatprep.subr.mxu0 0.0
    %841 = vmatpush1.xpose.msra.mxu0 0.0
    %842 = vmatprep.subr.mxu0 0.0
    %843 = vmatpush1.xpose.msra.mxu0 0.0
    %844 = vmatprep.subr.mxu0 0.0
    %845 = vmatpush1.xpose.msra.mxu0 0.0
    %846 = vmatprep.subr.mxu0 0.0
    %847 = vmatpush1.xpose.msra.mxu0 0.0
    %848 = vmatprep.subr.mxu0 0.0
    %849 = vmatpush1.xpose.msra.mxu0 0.0
    %850 = vmatprep.subr.mxu0 0.0
    %851 = vmatpush1.xpose.msra.mxu0 0.0
    %852 = vmatprep.subr.mxu0 0.0
    %853 = vmatpush1.xpose.msra.mxu0 0.0
    %854 = vmatprep.subr.mxu0 0.0
    %855 = vmatpush1.xpose.msra.mxu0 0.0
    %856 = vmatprep.subr.mxu0 0.0
    %857 = vmatpush1.xpose.msra.mxu0 0.0
    %858 = vmatprep.subr.mxu0 0.0
    %859 = vmatpush1.xpose.msra.mxu0 0.0
    %860 = vmatprep.subr.mxu0 0.0
    %861 = vmatpush1.xpose.msra.mxu0 0.0
    %862 = vmatprep.subr.mxu0 0.0
    %863 = vmatpush1.xpose.msra.mxu0 0.0
    %864 = vmatprep.subr.mxu0 0.0
    %865 = vmatpush1.xpose.msra.mxu0 0.0
    %866 = vmatprep.subr.mxu0 0.0
    %867 = vmatpush1.xpose.msra.mxu0 0.0
    %868 = vmatprep.subr.mxu0 0.0
    %869 = vmatpush1.xpose.msra.mxu0 0.0
    %870 = vmatprep.subr.mxu0 0.0
    %871 = vmatpush1.xpose.msra.mxu0 0.0
    %872 = vmatprep.subr.mxu0 0.0
    %873 = vmatpush1.xpose.msra.mxu0 0.0
    %874 = vmatprep.subr.mxu0 0.0
    %875 = vmatpush1.xpose.msra.mxu0 0.0
    %876 = vmatprep.subr.mxu0 0.0
    %877 = vmatpush1.xpose.msra.mxu0 0.0
    %878 = vmatprep.subr.mxu0 0.0
    %879 = vmatpush1.xpose.msra.mxu0 0.0
    %880 = vmatprep.subr.mxu0 0.0
    %881 = vmatpush1.xpose.msra.mxu0 0.0
    %882 = vmatprep.subr.mxu0 0.0
    %883 = vmatpush1.xpose.msra.mxu0 0.0
    %884 = vmatprep.subr.mxu0 0.0
    %885 = vmatpush1.xpose.msra.mxu0 0.0
    %886 = vmatprep.subr.mxu0 0.0
    %887 = vmatpush1.xpose.msra.mxu0 0.0
    %888 = vmatprep.subr.mxu0 0.0
    %889 = vmatpush1.xpose.msra.mxu0 0.0
    %890 = vmatprep.subr.mxu0 0.0
    %891 = vmatpush1.xpose.msra.mxu0 0.0
    %892 = vmatprep.subr.mxu0 0.0
    %893 = vmatpush1.xpose.msra.mxu0 0.0
    %894 = vmatprep.mubr.f32.mxu0 0.0
    %895 = vmatmul.mubr.f32.gmra.mrb[0].mxu0 %v824
    %v896 = vpop.f32.mrb[0].mxu0
    %v897 = vadd.f32 0.0, %v896
    %v898 = vpop.f32.mrb[0].mxu0
    %899 = vdwg.mxu0
    %v900 = vsel %vm382, %v897, -inf
    %901 = vmax.xlane.f32.xlu0 %v900
    %v902 = vpop.xlane.xlu0 %901
    %v903 = vsub.f32 %v897, %v902
    %v904 = vmul.f32 %v903, 1.442695
    %v905 = vpow.pop %v904
    %v906 = vsel %vm382, %v905, 0.0
    %907 = vadd.xlane.f32.xlu0 %v906
    %v908 = vpop.xlane.xlu0 %907
    %v909 = vrcp.pop %v908
    %v910 = vmul.f32 %v905, %v909
    %911 = vrot.lane.b32.xlu0 %v295, 32
    %v912 = vpop.permute.xlu0 %911
    %913 = vrot.lane.b32.xlu0 %v300, 32
    %v914 = vpop.permute.xlu0 %913
    %v917 = vsel %vm382, %v910, 0
    %v919 = vsel %vm397, %v914, 0
    %921 = vmatprep.subr.mxu0 0.0
    %922 = vmatpush1.msra.mxu0 %v912
    %923 = vmatprep.subr.mxu0 0.0
    %924 = vmatpush1.msra.mxu0 %v919
    %925 = vmatprep.subr.mxu0 0.0
    %926 = vmatpush1.msra.mxu0 0.0
    %927 = vmatprep.subr.mxu0 0.0
    %928 = vmatpush1.msra.mxu0 0.0
    %929 = vmatprep.subr.mxu0 0.0
    %930 = vmatpush1.msra.mxu0 0.0
    %931 = vmatprep.subr.mxu0 0.0
    %932 = vmatpush1.msra.mxu0 0.0
    %933 = vmatprep.subr.mxu0 0.0
    %934 = vmatpush1.msra.mxu0 0.0
    %935 = vmatprep.subr.mxu0 0.0
    %936 = vmatpush1.msra.mxu0 0.0
    %937 = vmatprep.subr.mxu0 0.0
    %938 = vmatpush1.msra.mxu0 0.0
    %939 = vmatprep.subr.mxu0 0.0
    %940 = vmatpush1.msra.mxu0 0.0
    %941 = vmatprep.subr.mxu0 0.0
    %942 = vmatpush1.msra.mxu0 0.0
    %943 = vmatprep.subr.mxu0 0.0
    %944 = vmatpush1.msra.mxu0 0.0
    %945 = vmatprep.subr.mxu0 0.0
    %946 = vmatpush1.msra.mxu0 0.0
    %947 = vmatprep.subr.mxu0 0.0
    %948 = vmatpush1.msra.mxu0 0.0
    %949 = vmatprep.subr.mxu0 0.0
    %950 = vmatpush1.msra.mxu0 0.0
    %951 = vmatprep.subr.mxu0 0.0
    %952 = vmatpush1.msra.mxu0 0.0
    %953 = vmatprep.subr.mxu0 0.0
    %954 = vmatpush1.msra.mxu0 0.0
    %955 = vmatprep.subr.mxu0 0.0
    %956 = vmatpush1.msra.mxu0 0.0
    %957 = vmatprep.subr.mxu0 0.0
    %958 = vmatpush1.msra.mxu0 0.0
    %959 = vmatprep.subr.mxu0 0.0
    %960 = vmatpush1.msra.mxu0 0.0
    %961 = vmatprep.subr.mxu0 0.0
    %962 = vmatpush1.msra.mxu0 0.0
    %963 = vmatprep.subr.mxu0 0.0
    %964 = vmatpush1.msra.mxu0 0.0
    %965 = vmatprep.subr.mxu0 0.0
    %966 = vmatpush1.msra.mxu0 0.0
    %967 = vmatprep.subr.mxu0 0.0
    %968 = vmatpush1.msra.mxu0 0.0
    %969 = vmatprep.subr.mxu0 0.0
    %970 = vmatpush1.msra.mxu0 0.0
    %971 = vmatprep.subr.mxu0 0.0
    %972 = vmatpush1.msra.mxu0 0.0
    %973 = vmatprep.subr.mxu0 0.0
    %974 = vmatpush1.msra.mxu0 0.0
    %975 = vmatprep.subr.mxu0 0.0
    %976 = vmatpush1.msra.mxu0 0.0
    %977 = vmatprep.subr.mxu0 0.0
    %978 = vmatpush1.msra.mxu0 0.0
    %979 = vmatprep.subr.mxu0 0.0
    %980 = vmatpush1.msra.mxu0 0.0
    %981 = vmatprep.subr.mxu0 0.0
    %982 = vmatpush1.msra.mxu0 0.0
    %983 = vmatprep.subr.mxu0 0.0
    %984 = vmatpush1.msra.mxu0 0.0
    %985 = vmatprep.mubr.f32.mxu0 0.0
    %986 = vmatmul.mubr.f32.gmra.mrb[0].mxu0 %v917
    %v987 = vpop.f32.mrb[0].mxu0
    %v988 = vadd.f32 0.0, %v987
    %v989 = vpop.f32.mrb[0].mxu0
    %990 = vdwg.mxu0
    %992 = vrot.lane.b32.xlu0 %v642, 32
    %v993 = vpop.permute.xlu0 %992
    %996 = vrot.lane.b32.xlu0 %v815, 64
    %v997 = vpop.permute.xlu0 %996
    %1000 = vrot.lane.b32.xlu0 %v988, 96
    %v1001 = vpop.permute.xlu0 %1000
    %v1003 = vsel %vm68, %v468, %v993
    %vm1004 = vcmask 523264
    %v1005 = vsel %vm1004, %v1003, %v997
    %vm1006 = vcmask 785408
    %v1007 = vsel %vm1006, %v1005, %v1001
    %v1008 = vld [vmem:[#allocation7 + $0x40] sm:$0xff]
    %v1009 = vld [vmem:[#allocation7 + $0x48] sm:$0xff]
    %v1010 = vld [vmem:[#allocation7 + $0x50] sm:$0xff]
    %v1011 = vld [vmem:[#allocation7 + $0x58] sm:$0xff]
    %v1012 = vld [vmem:[#allocation7 + $0x60] sm:$0xff]
    %v1013 = vld [vmem:[#allocation7 + $0x68] sm:$0xff]
    %v1014 = vld [vmem:[#allocation7 + $0x70] sm:$0xff]
    %v1015 = vld [vmem:[#allocation7 + $0x78] sm:$0xff]
    %v1016 = vld [vmem:[#allocation7 + $0x80] sm:$0xff]
    %v1017 = vld [vmem:[#allocation7 + $0x88] sm:$0xff]
    %v1018 = vld [vmem:[#allocation7 + $0x90] sm:$0xff]
    %v1019 = vld [vmem:[#allocation7 + $0x98] sm:$0xff]
    %v1020 = vld [vmem:[#allocation7 + $0xa0] sm:$0xff]
    %v1021 = vld [vmem:[#allocation7 + $0xa8] sm:$0xff]
    %v1022 = vld [vmem:[#allocation7 + $0xb0] sm:$0xff]
    %v1023 = vld [vmem:[#allocation7 + $0xb8] sm:$0xff]
    %v1024 = vld [vmem:[#allocation7 + $0xc0] sm:$0xff]
    %v1025 = vld [vmem:[#allocation7 + $0xc8] sm:$0xff]
    %v1026 = vld [vmem:[#allocation7 + $0xd0] sm:$0xff]
    %v1027 = vld [vmem:[#allocation7 + $0xd8] sm:$0xff]
    %1028 = vmatprep.subr.mxu0 0.0
    %1029 = vmatpush1.msra.mxu0 %v1008
    %1030 = vmatprep.subr.mxu0 0.0
    %1031 = vmatpush1.msra.mxu0 %v1009
    %1032 = vmatprep.subr.mxu0 0.0
    %1033 = vmatpush1.msra.mxu0 %v1010
    %1034 = vmatprep.subr.mxu0 0.0
    %1035 = vmatpush1.msra.mxu0 %v1011
    %1036 = vmatprep.subr.mxu0 0.0
    %1037 = vmatpush1.msra.mxu0 %v1012
    %1038 = vmatprep.subr.mxu0 0.0
    %1039 = vmatpush1.msra.mxu0 %v1013
    %1040 = vmatprep.subr.mxu0 0.0
    %1041 = vmatpush1.msra.mxu0 %v1014
    %1042 = vmatprep.subr.mxu0 0.0
    %1043 = vmatpush1.msra.mxu0 %v1015
    %1044 = vmatprep.subr.mxu0 0.0
    %1045 = vmatpush1.msra.mxu0 %v1016
    %1046 = vmatprep.subr.mxu0 0.0
    %1047 = vmatpush1.msra.mxu0 %v1017
    %1048 = vmatprep.subr.mxu0 0.0
    %1049 = vmatpush1.msra.mxu0 %v1018
    %1050 = vmatprep.subr.mxu0 0.0
    %1051 = vmatpush1.msra.mxu0 %v1019
    %1052 = vmatprep.subr.mxu0 0.0
    %1053 = vmatpush1.msra.mxu0 %v1020
    %1054 = vmatprep.subr.mxu0 0.0
    %1055 = vmatpush1.msra.mxu0 %v1021
    %1056 = vmatprep.subr.mxu0 0.0
    %1057 = vmatpush1.msra.mxu0 %v1022
    %1058 = vmatprep.subr.mxu0 0.0
    %1059 = vmatpush1.msra.mxu0 %v1023
    %1060 = vmatprep.subr.mxu0 0.0
    %1061 = vmatpush1.msra.mxu0 %v1024
    %1062 = vmatprep.subr.mxu0 0.0
    %1063 = vmatpush1.msra.mxu0 %v1025
    %1064 = vmatprep.subr.mxu0 0.0
    %1065 = vmatpush1.msra.mxu0 %v1026
    %1066 = vmatprep.subr.mxu0 0.0
    %1067 = vmatpush1.msra.mxu0 %v1027
    %1068 = vmatprep.subr.mxu0 0.0
    %1069 = vmatpush1.msra.mxu0 0.0
    %1070 = vmatprep.subr.mxu0 0.0
    %1071 = vmatpush1.msra.mxu0 0.0
    %1072 = vmatprep.subr.mxu0 0.0
    %1073 = vmatpush1.msra.mxu0 0.0
    %1074 = vmatprep.subr.mxu0 0.0
    %1075 = vmatpush1.msra.mxu0 0.0
    %1076 = vmatprep.subr.mxu0 0.0
    %1077 = vmatpush1.msra.mxu0 0.0
    %1078 = vmatprep.subr.mxu0 0.0
    %1079 = vmatpush1.msra.mxu0 0.0
    %1080 = vmatprep.subr.mxu0 0.0
    %1081 = vmatpush1.msra.mxu0 0.0
    %1082 = vmatprep.subr.mxu0 0.0
    %1083 = vmatpush1.msra.mxu0 0.0
    %1084 = vmatprep.subr.mxu0 0.0
    %1085 = vmatpush1.msra.mxu0 0.0
    %1086 = vmatprep.subr.mxu0 0.0
    %1087 = vmatpush1.msra.mxu0 0.0
    %1088 = vmatprep.subr.mxu0 0.0
    %1089 = vmatpush1.msra.mxu0 0.0
    %1090 = vmatprep.subr.mxu0 0.0
    %1091 = vmatpush1.msra.mxu0 0.0
    %1092 = vmatprep.mubr.f32.mxu0 %v70
    %1093 = vmatmul.mubr.f32.gmra.mrb[0].mxu0 %v1007
    %v1094 = vpop.f32.mrb[0].mxu0
    %v1095 = vadd.f32 %v57, %v1094
    %v1096 = vpop.f32.mrb[0].mxu0
    %1097 = vdwg.mxu0
    %v1098 = vsel %vm68, %v1095, 0.0
    %1099 = vadd.xlane.f32.xlu0 %v1098
    %v1100 = vpop.xlane.xlu0 %1099
    %v1101 = vrcp.pop 32.0
    %v1102 = vmul.f32 %v1100, %v1101
    %v1103 = vsub.f32 %v1095, %v1102
    %v1104 = vmul.f32 %v1103, %v1103
    %v1105 = vsel %vm68, %v1104, 0.0
    %1106 = vadd.xlane.f32.xlu0 %v1105
    %v1107 = vpop.xlane.xlu0 %1106
    %v1108 = vmul.f32 %v1107, %v1101
    %v1109 = vadd.f32 %v1108, 1e-05
    %v1110 = vrsqrt.pop %v1109
    %v1111 = vmul.f32 %v1103, %v1110
    %v1112 = vmul.f32 %v1111, %v58
    %v1113 = vadd.f32 %v1112, %v59
    %v1114 = vld [vmem:[#allocation7 + $0xe0] sm:$0xff]
    %v1115 = vld [vmem:[#allocation7 + $0xe8] sm:$0xff]
    %v1116 = vld [vmem:[#allocation7 + $0xf0] sm:$0xff]
    %v1117 = vld [vmem:[#allocation7 + $0xf8] sm:$0xff]
    %v1119 = vsel %vm68, %v1113, 0
    %1121 = vmatprep.subr.mxu0 0.0
    %1122 = vmatpush1.msra.mxu0 %v1114
    %1123 = vmatprep.subr.mxu0 0.0
    %1124 = vmatpush1.msra.mxu0 %v1115
    %1125 = vmatprep.subr.mxu0 0.0
    %1126 = vmatpush1.msra.mxu0 %v1116
    %1127 = vmatprep.subr.mxu0 0.0
    %1128 = vmatpush1.msra.mxu0 %v1117
    %1129 = vmatprep.subr.mxu0 0.0
    %1130 = vmatpush1.msra.mxu0 0.0
    %1131 = vmatprep.subr.mxu0 0.0
    %1132 = vmatpush1.msra.mxu0 0.0
    %1133 = vmatprep.subr.mxu0 0.0
    %1134 = vmatpush1.msra.mxu0 0.0
    %1135 = vmatprep.subr.mxu0 0.0
    %1136 = vmatpush1.msra.mxu0 0.0
    %1137 = vmatprep.subr.mxu0 0.0
    %1138 = vmatpush1.msra.mxu0 0.0
    %1139 = vmatprep.subr.mxu0 0.0
    %1140 = vmatpush1.msra.mxu0 0.0
    %1141 = vmatprep.subr.mxu0 0.0
    %1142 = vmatpush1.msra.mxu0 0.0
    %1143 = vmatprep.subr.mxu0 0.0
    %1144 = vmatpush1.msra.mxu0 0.0
    %1145 = vmatprep.subr.mxu0 0.0
    %1146 = vmatpush1.msra.mxu0 0.0
    %1147 = vmatprep.subr.mxu0 0.0
    %1148 = vmatpush1.msra.mxu0 0.0
    %1149 = vmatprep.subr.mxu0 0.0
    %1150 = vmatpush1.msra.mxu0 0.0
    %1151 = vmatprep.subr.mxu0 0.0
    %1152 = vmatpush1.msra.mxu0 0.0
    %1153 = vmatprep.subr.mxu0 0.0
    %1154 = vmatpush1.msra.mxu0 0.0
    %1155 = vmatprep.subr.mxu0 0.0
    %1156 = vmatpush1.msra.mxu0 0.0
    %1157 = vmatprep.subr.mxu0 0.0
    %1158 = vmatpush1.msra.mxu0 0.0
    %1159 = vmatprep.subr.mxu0 0.0
    %1160 = vmatpush1.msra.mxu0 0.0
    %1161 = vmatprep.subr.mxu0 0.0
    %1162 = vmatpush1.msra.mxu0 0.0
    %1163 = vmatprep.subr.mxu0 0.0
    %1164 = vmatpush1.msra.mxu0 0.0
    %1165 = vmatprep.subr.mxu0 0.0
    %1166 = vmatpush1.msra.mxu0 0.0
    %1167 = vmatprep.subr.mxu0 0.0
    %1168 = vmatpush1.msra.mxu0 0.0
    %1169 = vmatprep.subr.mxu0 0.0
    %1170 = vmatpush1.msra.mxu0 0.0
    %1171 = vmatprep.subr.mxu0 0.0
    %1172 = vmatpush1.msra.mxu0 0.0
    %1173 = vmatprep.subr.mxu0 0.0
    %1174 = vmatpush1.msra.mxu0 0.0
    %1175 = vmatprep.subr.mxu0 0.0
    %1176 = vmatpush1.msra.mxu0 0.0
    %1177 = vmatprep.subr.mxu0 0.0
    %1178 = vmatpush1.msra.mxu0 0.0
    %1179 = vmatprep.subr.mxu0 0.0
    %1180 = vmatpush1.msra.mxu0 0.0
    %1181 = vmatprep.subr.mxu0 0.0
    %1182 = vmatpush1.msra.mxu0 0.0
    %1183 = vmatprep.subr.mxu0 0.0
    %1184 = vmatpush1.msra.mxu0 0.0
    %1185 = vmatprep.mubr.f32.mxu0 0.0
    %1186 = vmatmul.mubr.f32.gmra.mrb[0].mxu0 %v1119
    %v1187 = vpop.f32.mrb[0].mxu0
    %v1188 = vadd.f32 %v60, %v1187
    %v1189 = vpop.f32.mrb[0].mxu0
    %1190 = vdwg.mxu0
    %v1191 = vmax.f32 %v1188, 0.0
    %v1192 = vld [vmem:[#allocation7 + $0x100] sm:$0xff]
    %v1193 = vld [vmem:[#allocation7 + $0x108] sm:$0xff]
    %v1194 = vld [vmem:[#allocation7 + $0x110] sm:$0xff]
    %v1195 = vld [vmem:[#allocation7 + $0x118] sm:$0xff]
    %v1197 = vsel %vm68, %v1191, 0
    %1199 = vmatprep.subr.mxu0 0.0
    %1200 = vmatpush1.msra.mxu0 %v1192
    %1201 = vmatprep.subr.mxu0 0.0
    %1202 = vmatpush1.msra.mxu0 %v1193
    %1203 = vmatprep.subr.mxu0 0.0
    %1204 = vmatpush1.msra.mxu0 %v1194
    %1205 = vmatprep.subr.mxu0 0.0
    %1206 = vmatpush1.msra.mxu0 %v1195
    %1207 = vmatprep.subr.mxu0 0.0
    %1208 = vmatpush1.msra.mxu0 0.0
    %1209 = vmatprep.subr.mxu0 0.0
    %1210 = vmatpush1.msra.mxu0 0.0
    %1211 = vmatprep.subr.mxu0 0.0
    %1212 = vmatpush1.msra.mxu0 0.0
    %1213 = vmatprep.subr.mxu0 0.0
    %1214 = vmatpush1.msra.mxu0 0.0
    %1215 = vmatprep.subr.mxu0 0.0
    %1216 = vmatpush1.msra.mxu0 0.0
    %1217 = vmatprep.subr.mxu0 0.0
    %1218 = vmatpush1.msra.mxu0 0.0
    %1219 = vmatprep.subr.mxu0 0.0
    %1220 = vmatpush1.msra.mxu0 0.0
    %1221 = vmatprep.subr.mxu0 0.0
    %1222 = vmatpush1.msra.mxu0 0.0
    %1223 = vmatprep.subr.mxu0 0.0
    %1224 = vmatpush1.msra.mxu0 0.0
    %1225 = vmatprep.subr.mxu0 0.0
    %1226 = vmatpush1.msra.mxu0 0.0
    %1227 = vmatprep.subr.mxu0 0.0
    %1228 = vmatpush1.msra.mxu0 0.0
    %1229 = vmatprep.subr.mxu0 0.0
    %1230 = vmatpush1.msra.mxu0 0.0
    %1231 = vmatprep.subr.mxu0 0.0
    %1232 = vmatpush1.msra.mxu0 0.0
    %1233 = vmatprep.subr.mxu0 0.0
    %1234 = vmatpush1.msra.mxu0 0.0
    %1235 = vmatprep.subr.mxu0 0.0
    %1236 = vmatpush1.msra.mxu0 0.0
    %1237 = vmatprep.subr.mxu0 0.0
    %1238 = vmatpush1.msra.mxu0 0.0
    %1239 = vmatprep.subr.mxu0 0.0
    %1240 = vmatpush1.msra.mxu0 0.0
    %1241 = vmatprep.subr.mxu0 0.0
    %1242 = vmatpush1.msra.mxu0 0.0
    %1243 = vmatprep.subr.mxu0 0.0
    %1244 = vmatpush1.msra.mxu0 0.0
    %1245 = vmatprep.subr.mxu0 0.0
    %1246 = vmatpush1.msra.mxu0 0.0
    %1247 = vmatprep.subr.mxu0 0.0
    %1248 = vmatpush1.msra.mxu0 0.0
    %1249 = vmatprep.subr.mxu0 0.0
    %1250 = vmatpush1.msra.mxu0 0.0
    %1251 = vmatprep.subr.mxu0 0.0
    %1252 = vmatpush1.msra.mxu0 0.0
    %1253 = vmatprep.subr.mxu0 0.0
    %1254 = vmatpush1.msra.mxu0 0.0
    %1255 = vmatprep.subr.mxu0 0.0
    %1256 = vmatpush1.msra.mxu0 0.0
    %1257 = vmatprep.subr.mxu0 0.0
    %1258 = vmatpush1.msra.mxu0 0.0
    %1259 = vmatprep.subr.mxu0 0.0
    %1260 = vmatpush1.msra.mxu0 0.0
    %1261 = vmatprep.subr.mxu0 0.0
    %1262 = vmatpush1.msra.mxu0 0.0
    %1263 = vmatprep.mubr.f32.mxu0 0.0
    %1264 = vmatmul.mubr.f32.gmra.mrb[0].mxu0 %v1197
    %v1265 = vpop.f32.mrb[0].mxu0
    %v1266 = vadd.f32 %v61, %v1265
    %v1267 = vpop.f32.mrb[0].mxu0
    %1268 = vdwg.mxu0
    %v1269 = vadd.f32 %v1266, %v1113
    %v1270 = vsel %vm68, %v1269, 0.0
    %1271 = vadd.xlane.f32.xlu0 %v1270
    %v1272 = vpop.xlane.xlu0 %1271
    %v1273 = vmul.f32 %v1272, %v1101
    %v1274 = vsub.f32 %v1269, %v1273
    %v1275 = vmul.f32 %v1274, %v1274
    %v1276 = vsel %vm68, %v1275, 0.0
    %1277 = vadd.xlane.f32.xlu0 %v1276
    %v1278 = vpop.xlane.xlu0 %1277
    %v1279 = vmul.f32 %v1278, %v1101
    %v1280 = vadd.f32 %v1279, 1e-05
    %v1281 = vrsqrt.pop %v1280
    %v1282 = vmul.f32 %v1274, %v1281
    %v1283 = vmul.f32 %v1282, %v62
    %v1284 = vadd.f32 %v1283, %v63
    %v1285 = vadd.f32 %v1284, %v54
    %v1286 = vld [vmem:[#allocation7 + $0x120] sm:$0xff]
    %v1287 = vld [vmem:[#allocation7 + $0x128] sm:$0xff]
    %v1288 = vld [vmem:[#allocation7 + $0x130] sm:$0xff]
    %v1289 = vld [vmem:[#allocation7 + $0x138] sm:$0xff]
    %v1291 = vsel %vm68, %v1285, 0
    %1293 = vmatprep.subr.mxu0 0.0
    %1294 = vmatpush1.msra.mxu0 %v1286
    %1295 = vmatprep.subr.mxu0 0.0
    %1296 = vmatpush1.msra.mxu0 %v1287
    %1297 = vmatprep.subr.mxu0 0.0
    %1298 = vmatpush1.msra.mxu0 %v1288
    %1299 = vmatprep.subr.mxu0 0.0
    %1300 = vmatpush1.msra.mxu0 %v1289
    %1301 = vmatprep.subr.mxu0 0.0
    %1302 = vmatpush1.msra.mxu0 0.0
    %1303 = vmatprep.subr.mxu0 0.0
    %1304 = vmatpush1.msra.mxu0 0.0
    %1305 = vmatprep.subr.mxu0 0.0
    %1306 = vmatpush1.msra.mxu0 0.0
    %1307 = vmatprep.subr.mxu0 0.0
    %1308 = vmatpush1.msra.mxu0 0.0
    %1309 = vmatprep.subr.mxu0 0.0
    %1310 = vmatpush1.msra.mxu0 0.0
    %1311 = vmatprep.subr.mxu0 0.0
    %1312 = vmatpush1.msra.mxu0 0.0
    %1313 = vmatprep.subr.mxu0 0.0
    %1314 = vmatpush1.msra.mxu0 0.0
    %1315 = vmatprep.subr.mxu0 0.0
    %1316 = vmatpush1.msra.mxu0 0.0
    %1317 = vmatprep.subr.mxu0 0.0
    %1318 = vmatpush1.msra.mxu0 0.0
    %1319 = vmatprep.subr.mxu0 0.0
    %1320 = vmatpush1.msra.mxu0 0.0
    %1321 = vmatprep.subr.mxu0 0.0
    %1322 = vmatpush1.msra.mxu0 0.0
    %1323 = vmatprep.subr.mxu0 0.0
    %1324 = vmatpush1.msra.mxu0 0.0
    %1325 = vmatprep.subr.mxu0 0.0
    %1326 = vmatpush1.msra.mxu0 0.0
    %1327 = vmatprep.subr.mxu0 0.0
    %1328 = vmatpush1.msra.mxu0 0.0
    %1329 = vmatprep.subr.mxu0 0.0
    %1330 = vmatpush1.msra.mxu0 0.0
    %1331 = vmatprep.subr.mxu0 0.0
    %1332 = vmatpush1.msra.mxu0 0.0
    %1333 = vmatprep.subr.mxu0 0.0
    %1334 = vmatpush1.msra.mxu0 0.0
    %1335 = vmatprep.subr.mxu0 0.0
    %1336 = vmatpush1.msra.mxu0 0.0
    %1337 = vmatprep.subr.mxu0 0.0
    %1338 = vmatpush1.msra.mxu0 0.0
    %1339 = vmatprep.subr.mxu0 0.0
    %1340 = vmatpush1.msra.mxu0 0.0
    %1341 = vmatprep.subr.mxu0 0.0
    %1342 = vmatpush1.msra.mxu0 0.0
    %1343 = vmatprep.subr.mxu0 0.0
    %1344 = vmatpush1.msra.mxu0 0.0
    %1345 = vmatprep.subr.mxu0 0.0
    %1346 = vmatpush1.msra.mxu0 0.0
    %1347 = vmatprep.subr.mxu0 0.0
    %1348 = vmatpush1.msra.mxu0 0.0
    %1349 = vmatprep.subr.mxu0 0.0
    %1350 = vmatpush1.msra.mxu0 0.0
    %1351 = vmatprep.subr.mxu0 0.0
    %1352 = vmatpush1.msra.mxu0 0.0
    %1353 = vmatprep.subr.mxu0 0.0
    %1354 = vmatpush1.msra.mxu0 0.0
    %1355 = vmatprep.subr.mxu0 0.0
    %1356 = vmatpush1.msra.mxu0 0.0
    %1357 = vmatprep.mubr.f32.mxu0 0.0
    %1358 = vmatmul.mubr.f32.gmra.mrb[0].mxu0 %v1291
    %v1359 = vpop.f32.mrb[0].mxu0
    %v1360 = vadd.f32 0.0, %v1359
    %v1361 = vpop.f32.mrb[0].mxu0
    %1362 = vdwg.mxu0
    %1363 = vst [vmem:[#allocation8] sm:$0xff] %v1360
    // Predicated region
    $region26: #{tpu_custom_call.1} parent=1 // pred_check
      _
    $region27: #{tpu_custom_call.1} parent=1 // pred_check_branch
      %1365 = sbr.rel (0) target = $region29
    $region28: #{tpu_custom_call.1} parent=1 // pred_region
      %s1367 = ssub.s32 128, 128
      %1368 = vsyncadd [#allocation4], %s1367
      %s1370 = sshll.u32 [#allocation8], 4
      %s1371 = int_to_ptr.vmem [resolvable:$true] %s1370
      %1373 = dma.vmem_to_hbm [thread:$0]  %s1371, 128, %s3, [#allocation4]
    $region29: #{tpu_custom_call.1} parent=1 // pred_fallthru
      _
    // Predicated region
    $region30: #{tpu_custom_call.1} parent=1 // pred_check
      _
    $region31: #{tpu_custom_call.1} parent=1 // pred_check_branch
      %1375 = sbr.rel (0) target = $region33
    $region32: #{tpu_custom_call.1} parent=1 // pred_region
      %1376 = dma.done [#allocation4], 128
    $region33: #{tpu_custom_call.1} parent=1 // pred_fallthru
      _
    %1377 = vsyncpa [#allocation3], 1
    %1378 = vsyncpa [#allocation6], 1
    %1379 = vsyncpa [#allocation4], 1

</llo_original>
